<compile_context>
chip_gen: v5e
topology: v5e:2x2
jax: 0.10.0
libtpu: 0.0.40
codegen_flags: <defaults>
</compile_context>

<pallas_src>
import functools

import numpy as np
import jax
import jax.numpy as jnp
from jax import lax
from jax.experimental import pallas as pl
from jax.experimental.pallas import tpu as pltpu

EPS = 1e-5


# ---------------------------------------------------------------------------
# Pallas kernels
# ---------------------------------------------------------------------------
def _conv_layer_kernel(*refs, taps, apply_act, pad_out, compute_dtype):
    """One sample: [optional inline BN+ReLU on input] -> k=3 Conv1d (no bias)
    -> raw conv output + per-sample (sum, sum^2) BatchNorm partial statistics.

    refs (apply_act=False): (x_ref, w_ref, y_ref, stats_ref)
    refs (apply_act=True) : (x_ref, w_ref, scale_ref, shift_ref, y_ref, stats_ref)

    x_ref : (1, Cin, Lout+2) zero-padded slab       (taps=False)
            (3, 1, Cin, Lout) stride-gathered taps  (taps=True)
    w_ref : (3, Cout, Cin)
    y_ref : (1, Cout, Lout+2) if pad_out else (1, Cout, Lout)
    stats_ref : (1, Cout, 2)  [sum, sum of squares] over this sample's Lout columns
    """
    if apply_act:
        x_ref, w_ref, scale_ref, shift_ref, y_ref, stats_ref = refs
    else:
        x_ref, w_ref, y_ref, stats_ref = refs
        scale_ref = shift_ref = None

    cout = w_ref.shape[1]
    lout = y_ref.shape[2] - (2 if pad_out else 0)

    if taps:
        def tap(dk):
            return x_ref[dk, 0]                              # (Cin, Lout)
    else:
        xin = x_ref[0]                                       # (Cin, Lout+2)
        if apply_act:
            # Fused BN+ReLU of the previous layer, then re-zero the two padding
            # columns (the affine+relu would otherwise turn them into relu(shift)).
            a = jnp.maximum(
                xin.astype(jnp.float32) * scale_ref[...] + shift_ref[...], 0.0)
            col = lax.broadcasted_iota(jnp.int32, a.shape, 1)
            xin = jnp.where((col >= 1) & (col <= a.shape[1] - 2), a, 0.0)
        xin = xin.astype(compute_dtype)

        def tap(dk):
            return xin[:, dk:dk + lout]                      # shifted slice, no HBM copy

    # k=3 conv as 3 shifted matmuls, f32 accumulation on the MXU.
    acc = jnp.zeros((cout, lout), jnp.float32)
    for dk in range(3):
        acc = acc + jnp.dot(w_ref[dk], tap(dk),
                            preferred_element_type=jnp.float32)

    if pad_out:
        zcol = jnp.zeros((cout, 1), dtype=y_ref.dtype)
        y_ref[0] = jnp.concatenate([zcol, acc.astype(y_ref.dtype), zcol], axis=-1)
    else:
        y_ref[0] = acc.astype(y_ref.dtype)

    # Single-pass partial BatchNorm statistics (sum, sum of squares).
    ssum = jnp.sum(acc, axis=-1, keepdims=True)              # (Cout, 1)
    ssq = jnp.sum(acc * acc, axis=-1, keepdims=True)         # (Cout, 1)
    stats_ref[0] = jnp.concatenate([ssum, ssq], axis=-1)     # (Cout, 2)


def _bn_relu_kernel(y_ref, scale_ref, shift_ref, o_ref):
    """Tiled elementwise BN(affine form) + ReLU epilogue for the last layer."""
    o_ref[0] = jnp.maximum(
        y_ref[0].astype(jnp.float32) * scale_ref[...] + shift_ref[...], 0.0
    ).astype(o_ref.dtype)


# ---------------------------------------------------------------------------
# pallas_call wrappers
# ---------------------------------------------------------------------------
def _conv_bn_stats_layer(xin, w3, scale, shift, *, taps, apply_act, pad_out,
                         lout, out_dtype, compute_dtype):
    if taps:
        _, n, cin, _ = xin.shape
        x_spec = pl.BlockSpec((3, 1, cin, lout), lambda nb: (0, nb, 0, 0))
    else:
        n, cin, lp = xin.shape
        x_spec = pl.BlockSpec((1, cin, lp), lambda nb: (nb, 0, 0))
    cout = w3.shape[1]
    lo = lout + (2 if pad_out else 0)

    in_specs = [x_spec, pl.BlockSpec(w3.shape, lambda nb: (0, 0, 0))]
    args = [xin, w3]
    if apply_act:
        in_specs += [pl.BlockSpec(scale.shape, lambda nb: (0, 0)),
                     pl.BlockSpec(shift.shape, lambda nb: (0, 0))]
        args += [scale, shift]

    kernel = functools.partial(_conv_layer_kernel, taps=taps, apply_act=apply_act,
                               pad_out=pad_out, compute_dtype=compute_dtype)

    itemsize = jnp.dtype(out_dtype).itemsize
    flops = 2 * cout * cin * 3 * n * lout
    bytes_accessed = (xin.size * xin.dtype.itemsize + w3.size * w3.dtype.itemsize
                      + n * cout * lo * itemsize + n * cout * 2 * 4)

    y, stats = pl.pallas_call(
        kernel,
        grid=(n,),
        in_specs=in_specs,
        out_specs=[pl.BlockSpec((1, cout, lo), lambda nb: (nb, 0, 0)),
                   pl.BlockSpec((1, cout, 2), lambda nb: (nb, 0, 0))],
        out_shape=[jax.ShapeDtypeStruct((n, cout, lo), out_dtype),
                   jax.ShapeDtypeStruct((n, cout, 2), jnp.float32)],
        compiler_params=pltpu.CompilerParams(dimension_semantics=("parallel",)),
        cost_estimate=pl.CostEstimate(flops=flops, transcendentals=0,
                                      bytes_accessed=bytes_accessed),
    )(*args)
    return y, stats


def _bn_relu(y, scale, shift, out_dtype=jnp.float32):
    n, c, l = y.shape
    return pl.pallas_call(
        _bn_relu_kernel,
        grid=(n,),
        in_specs=[pl.BlockSpec((1, c, l), lambda nb: (nb, 0, 0)),
                  pl.BlockSpec(scale.shape, lambda nb: (0, 0)),
                  pl.BlockSpec(shift.shape, lambda nb: (0, 0))],
        out_specs=pl.BlockSpec((1, c, l), lambda nb: (nb, 0, 0)),
        out_shape=jax.ShapeDtypeStruct((n, c, l), out_dtype),
        compiler_params=pltpu.CompilerParams(dimension_semantics=("parallel",)),
        cost_estimate=pl.CostEstimate(
            flops=2 * n * c * l, transcendentals=0,
            bytes_accessed=y.size * y.dtype.itemsize + n * c * l * 4 + 4 * c * 4),
    )(y, scale, shift)


def _bn_affine(stats, gamma, beta, count):
    """Fold summed partial stats into per-channel scale/shift (training-mode BN)."""
    tot = jnp.sum(stats, axis=0)                             # (C, 2)
    mean = tot[:, 0] / count
    var = tot[:, 1] / count - mean * mean                    # biased batch variance
    scale = gamma.astype(jnp.float32) * lax.rsqrt(var + EPS)
    shift = beta.astype(jnp.float32) - mean * scale
    return scale[:, None], shift[:, None]                    # (C, 1) each


# ---------------------------------------------------------------------------
# conv_block forward (Pallas)
# ---------------------------------------------------------------------------
def conv_block_forward(x, params, stride, *, compute_dtype=jnp.float32):
    w1, b1, g1, be1, w2, b2, g2, be2 = params
    del b1, b2  # conv bias cancels exactly under training-mode BatchNorm

    n, cin, l = x.shape
    cout = w1.shape[0]
    lout1 = (l + 2 - 3) // stride + 1
    lout2 = lout1                                            # conv2: k=3, s=1, p=1

    xp = jnp.pad(x, ((0, 0), (0, 0), (1, 1)))                # (N, Cin, L+2)
    w1t = jnp.transpose(w1, (2, 0, 1)).astype(compute_dtype)  # (3, Cout, Cin)
    w2t = jnp.transpose(w2, (2, 0, 1)).astype(compute_dtype)  # (3, Cout, Cout)

    if stride == 1:
        xin1, taps1 = xp.astype(compute_dtype), False
    else:
        # TODO(synk): replace this wrapper-side tap gather (only layer 1, smallest
        # tensor) with an in-kernel strided pl.ds load once lane-strided loads are
        # verified on all target generations.
        xin1 = jnp.stack(
            [xp[:, :, dk: dk + stride * (lout1 - 1) + 1: stride] for dk in range(3)],
            axis=0).astype(compute_dtype)                    # (3, N, Cin, Lout1)
        taps1 = True

    # conv1 (no bias) + BN1 partial stats; output kept zero-padded for conv2.
    y1raw, stats1 = _conv_bn_stats_layer(
        xin1, w1t, None, None, taps=taps1, apply_act=False, pad_out=True,
        lout=lout1, out_dtype=compute_dtype, compute_dtype=compute_dtype)
    scale1, shift1 = _bn_affine(stats1, g1, be1, n * lout1)

    # conv2 with BN1+ReLU1 fused into its input read; emits BN2 partial stats.
    y2raw, stats2 = _conv_bn_stats_layer(
        y1raw, w2t, scale1, shift1, taps=False, apply_act=True, pad_out=False,
        lout=lout2, out_dtype=compute_dtype, compute_dtype=compute_dtype)
    scale2, shift2 = _bn_affine(stats2, g2, be2, n * lout2)

    # Final BN2+ReLU2 epilogue (tiled, lane-dense), f32 output in NCL layout.
    return _bn_relu(y2raw, scale2, shift2, out_dtype=jnp.float32)


# ---------------------------------------------------------------------------
# Pure-JAX reference (with conv bias, to verify the bias-cancellation claim)
# ---------------------------------------------------------------------------
def conv_block_ref(x, params, stride):
    w1, b1, g1, be1, w2, b2, g2, be2 = params

    def conv_bn_relu(x, w, b, g, be, s):
        y = lax.conv_general_dilated(
            x, w, window_strides=(s,), padding=[(1, 1)],
            dimension_numbers=("NCH", "OIH", "NCH"),
        ) + b[None, :, None]
        mean = y.mean(axis=(0, 2), keepdims=True)
        var = ((y - mean) ** 2).mean(axis=(0, 2), keepdims=True)
        y = (y - mean) / jnp.sqrt(var + EPS) * g[None, :, None] + be[None, :, None]
        return jnp.maximum(y, 0.0)

    y = conv_bn_relu(x, w1, b1, g1, be1, stride)
    y = conv_bn_relu(y, w2, b2, g2, be2, 1)
    return y


# ---------------------------------------------------------------------------
if __name__ == "__main__":
    key = jax.random.PRNGKey(0)
    n, cin, cout, length = 2, 4, 8, 16

    k_x, k_w1, k_b1, k_w2, k_b2 = jax.random.split(key, 5)
    x = jax.random.normal(k_x, (n, cin, length), dtype=jnp.float32)

    # Deterministic PyTorch-like init (fan-in scale); BN gamma=1, beta=0.
    s1 = 1.0 / np.sqrt(cin * 3)
    s2 = 1.0 / np.sqrt(cout * 3)
    w1 = jax.random.uniform(k_w1, (cout, cin, 3), jnp.float32, -s1, s1)
    b1 = jax.random.uniform(k_b1, (cout,), jnp.float32, -s1, s1)
    w2 = jax.random.uniform(k_w2, (cout, cout, 3), jnp.float32, -s2, s2)
    b2 = jax.random.uniform(k_b2, (cout,), jnp.float32, -s2, s2)
    g1 = jnp.ones((cout,), jnp.float32)
    be1 = jnp.zeros((cout,), jnp.float32)
    g2 = jnp.ones((cout,), jnp.float32)
    be2 = jnp.zeros((cout,), jnp.float32)
    params = (w1, b1, g1, be1, w2, b2, g2, be2)

    fwd = jax.jit(conv_block_forward, static_argnums=(2,),
                  static_argnames=("compute_dtype",))

    # f32 path: strided (taps) and unit-stride (in-kernel shifted slices) variants.
    for stride in (2, 1):
        out = jax.block_until_ready(fwd(x, params, stride))
        ref = jax.block_until_ready(conv_block_ref(x, params, stride))
        assert out.shape == ref.shape, (stride, out.shape, ref.shape)
        np.testing.assert_allclose(np.asarray(out), np.asarray(ref),
                                   rtol=1e-3, atol=1e-3)

    # bf16 MXU path (v6e/v7x feedback): bf16 operands, f32 accumulation & BN math.
    out_bf16 = jax.block_until_ready(
        fwd(x, params, 2, compute_dtype=jnp.bfloat16))
    ref2 = jax.block_until_ready(conv_block_ref(x, params, 2))
    np.testing.assert_allclose(np.asarray(out_bf16), np.asarray(ref2),
                               rtol=5e-2, atol=5e-2)

    print("KERNEL_OK")
</pallas_src>

<mosaic_0001>
module attributes {stable_mosaic.version = 11 : i64} {
  func.func @_conv_layer_kernel(%arg0: i32, %arg1: memref<3x1x4x8xf32, #tpu.memory_space<vmem>>, %arg2: memref<3x8x4xf32, #tpu.memory_space<vmem>>, %arg3: memref<1x8x10xf32, #tpu.memory_space<vmem>>, %arg4: memref<1x8x2xf32, #tpu.memory_space<vmem>>) attributes {dimension_semantics = [#tpu.dimension_semantics<parallel>], iteration_bounds = array<i64: 2>, scalar_prefetch = 0 : i64, scratch_operands = 0 : i64, tpu.core_type = #tpu.core_type<tc>, window_params = [{transform_indices = @transform_0, window_bounds = array<i64: 3, 1, 4, 8>}, {pipeline_mode = #tpu.pipeline_mode<synchronous>, transform_indices = @transform_1, window_bounds = array<i64: 3, 8, 4>}, {transform_indices = @transform_2, window_bounds = array<i64: 1, 8, 10>}, {transform_indices = @transform_3, window_bounds = array<i64: 1, 8, 2>}]} {
    %cst = arith.constant 0.000000e+00 : f32
    %0 = vector.broadcast %cst : f32 to vector<8x8xf32>
    %c0 = arith.constant 0 : index
    %c0_0 = arith.constant 0 : index
    %c0_1 = arith.constant 0 : index
    %1 = vector.load %arg2[%c0, %c0_0, %c0_1] : memref<3x8x4xf32, #tpu.memory_space<vmem>>, vector<1x8x4xf32>
    %2 = vector.shape_cast %1 : vector<1x8x4xf32> to vector<8x4xf32>
    %c0_2 = arith.constant 0 : index
    %c0_3 = arith.constant 0 : index
    %c0_4 = arith.constant 0 : index
    %c0_5 = arith.constant 0 : index
    %3 = vector.load %arg1[%c0_2, %c0_3, %c0_4, %c0_5] : memref<3x1x4x8xf32, #tpu.memory_space<vmem>>, vector<1x1x4x8xf32>
    %4 = vector.shape_cast %3 : vector<1x1x4x8xf32> to vector<4x8xf32>
    %cst_6 = arith.constant dense<0.000000e+00> : vector<8x8xf32>
    %5 = tpu.matmul %2, %4, %cst_6 {dimension_numbers = #tpu.dot_dimension_numbers<[1], [0], [0], [1], [0, 0, 1, 1], [], []>} : vector<8x4xf32>, vector<4x8xf32>, vector<8x8xf32> -> vector<8x8xf32>
    %6 = arith.addf %0, %5 : vector<8x8xf32>
    %c1 = arith.constant 1 : index
    %c0_7 = arith.constant 0 : index
    %c0_8 = arith.constant 0 : index
    %7 = vector.load %arg2[%c1, %c0_7, %c0_8] : memref<3x8x4xf32, #tpu.memory_space<vmem>>, vector<1x8x4xf32>
    %8 = vector.shape_cast %7 : vector<1x8x4xf32> to vector<8x4xf32>
    %c1_9 = arith.constant 1 : index
    %c0_10 = arith.constant 0 : index
    %c0_11 = arith.constant 0 : index
    %c0_12 = arith.constant 0 : index
    %9 = vector.load %arg1[%c1_9, %c0_10, %c0_11, %c0_12] : memref<3x1x4x8xf32, #tpu.memory_space<vmem>>, vector<1x1x4x8xf32>
    %10 = vector.shape_cast %9 : vector<1x1x4x8xf32> to vector<4x8xf32>
    %cst_13 = arith.constant dense<0.000000e+00> : vector<8x8xf32>
    %11 = tpu.matmul %8, %10, %cst_13 {dimension_numbers = #tpu.dot_dimension_numbers<[1], [0], [0], [1], [0, 0, 1, 1], [], []>} : vector<8x4xf32>, vector<4x8xf32>, vector<8x8xf32> -> vector<8x8xf32>
    %12 = arith.addf %6, %11 : vector<8x8xf32>
    %c2 = arith.constant 2 : index
    %c0_14 = arith.constant 0 : index
    %c0_15 = arith.constant 0 : index
    %13 = vector.load %arg2[%c2, %c0_14, %c0_15] : memref<3x8x4xf32, #tpu.memory_space<vmem>>, vector<1x8x4xf32>
    %14 = vector.shape_cast %13 : vector<1x8x4xf32> to vector<8x4xf32>
    %c2_16 = arith.constant 2 : index
    %c0_17 = arith.constant 0 : index
    %c0_18 = arith.constant 0 : index
    %c0_19 = arith.constant 0 : index
    %15 = vector.load %arg1[%c2_16, %c0_17, %c0_18, %c0_19] : memref<3x1x4x8xf32, #tpu.memory_space<vmem>>, vector<1x1x4x8xf32>
    %16 = vector.shape_cast %15 : vector<1x1x4x8xf32> to vector<4x8xf32>
    %cst_20 = arith.constant dense<0.000000e+00> : vector<8x8xf32>
    %17 = tpu.matmul %14, %16, %cst_20 {dimension_numbers = #tpu.dot_dimension_numbers<[1], [0], [0], [1], [0, 0, 1, 1], [], []>} : vector<8x4xf32>, vector<4x8xf32>, vector<8x8xf32> -> vector<8x8xf32>
    %18 = arith.addf %12, %17 : vector<8x8xf32>
    %cst_21 = arith.constant 0.000000e+00 : f32
    %19 = vector.broadcast %cst_21 : f32 to vector<8x1xf32>
    %20 = tpu.concatenate %19, %18, %19 in 1 : vector<8x1xf32>, vector<8x8xf32>, vector<8x1xf32> -> vector<8x10xf32>
    %c0_22 = arith.constant 0 : index
    %c0_23 = arith.constant 0 : index
    %c0_24 = arith.constant 0 : index
    %21 = vector.load %arg3[%c0_22, %c0_23, %c0_24] : memref<1x8x10xf32, #tpu.memory_space<vmem>>, vector<1x8x10xf32>
    %22 = vector.shape_cast %21 : vector<1x8x10xf32> to vector<8x10xf32>
    %23 = vector.shape_cast %20 : vector<8x10xf32> to vector<1x8x10xf32>
    tpu.vector_store %arg3[%c0_22, %c0_23, %c0_24], %23 {strides = array<i32>} : memref<1x8x10xf32, #tpu.memory_space<vmem>>, vector<1x8x10xf32>,
    %cst_25 = arith.constant dense<0.000000e+00> : vector<8xf32>
    %24 = vector.multi_reduction <add>, %18, %cst_25 [1] : vector<8x8xf32> to vector<8xf32>
    %25 = vector.shape_cast %24 : vector<8xf32> to vector<8x1xf32>
    %26 = arith.mulf %18, %18 : vector<8x8xf32>
    %cst_26 = arith.constant dense<0.000000e+00> : vector<8xf32>
    %27 = vector.multi_reduction <add>, %26, %cst_26 [1] : vector<8x8xf32> to vector<8xf32>
    %28 = vector.shape_cast %27 : vector<8xf32> to vector<8x1xf32>
    %29 = tpu.concatenate %25, %28 in 1 : vector<8x1xf32>, vector<8x1xf32> -> vector<8x2xf32>
    %c0_27 = arith.constant 0 : index
    %c0_28 = arith.constant 0 : index
    %c0_29 = arith.constant 0 : index
    %30 = vector.load %arg4[%c0_27, %c0_28, %c0_29] : memref<1x8x2xf32, #tpu.memory_space<vmem>>, vector<1x8x2xf32>
    %31 = vector.shape_cast %30 : vector<1x8x2xf32> to vector<8x2xf32>
    %32 = vector.shape_cast %29 : vector<8x2xf32> to vector<1x8x2xf32>
    tpu.vector_store %arg4[%c0_27, %c0_28, %c0_29], %32 {strides = array<i32>} : memref<1x8x2xf32, #tpu.memory_space<vmem>>, vector<1x8x2xf32>,
    return
  }
  func.func @transform_0(%arg0: i32) -> (i32, i32, i32, i32) {
    %c0_i32 = arith.constant 0 : i32
    %c0_i32_0 = arith.constant 0 : i32
    %c0_i32_1 = arith.constant 0 : i32
    %c0_i32_2 = arith.constant 0 : i32
    return %c0_i32, %arg0, %c0_i32_0, %c0_i32_1 : i32, i32, i32, i32
  }
  func.func @transform_1(%arg0: i32) -> (i32, i32, i32) {
    %c0_i32 = arith.constant 0 : i32
    %c0_i32_0 = arith.constant 0 : i32
    %c0_i32_1 = arith.constant 0 : i32
    %c0_i32_2 = arith.constant 0 : i32
    return %c0_i32, %c0_i32_0, %c0_i32_1 : i32, i32, i32
  }
  func.func @transform_2(%arg0: i32) -> (i32, i32, i32) {
    %c0_i32 = arith.constant 0 : i32
    %c0_i32_0 = arith.constant 0 : i32
    %c0_i32_1 = arith.constant 0 : i32
    return %arg0, %c0_i32, %c0_i32_0 : i32, i32, i32
  }
  func.func @transform_3(%arg0: i32) -> (i32, i32, i32) {
    %c0_i32 = arith.constant 0 : i32
    %c0_i32_0 = arith.constant 0 : i32
    %c0_i32_1 = arith.constant 0 : i32
    return %arg0, %c0_i32, %c0_i32_0 : i32, i32, i32
  }
}

module attributes {stable_mosaic.version = 11 : i64} {
  func.func @_bn_relu_kernel(%arg0: i32, %arg1: memref<1x8x8xf32, #tpu.memory_space<vmem>>, %arg2: memref<8x1xf32, #tpu.memory_space<vmem>>, %arg3: memref<8x1xf32, #tpu.memory_space<vmem>>, %arg4: memref<1x8x8xf32, #tpu.memory_space<vmem>>) attributes {dimension_semantics = [#tpu.dimension_semantics<parallel>], iteration_bounds = array<i64: 2>, scalar_prefetch = 0 : i64, scratch_operands = 0 : i64, tpu.core_type = #tpu.core_type<tc>, window_params = [{transform_indices = @transform_0, window_bounds = array<i64: 1, 8, 8>}, {pipeline_mode = #tpu.pipeline_mode<synchronous>, transform_indices = @transform_1, window_bounds = array<i64: 8, 1>}, {pipeline_mode = #tpu.pipeline_mode<synchronous>, transform_indices = @transform_2, window_bounds = array<i64: 8, 1>}, {transform_indices = @transform_3, window_bounds = array<i64: 1, 8, 8>}]} {
    %c0 = arith.constant 0 : index
    %c0_0 = arith.constant 0 : index
    %c0_1 = arith.constant 0 : index
    %0 = vector.load %arg1[%c0, %c0_0, %c0_1] : memref<1x8x8xf32, #tpu.memory_space<vmem>>, vector<1x8x8xf32>
    %1 = vector.shape_cast %0 : vector<1x8x8xf32> to vector<8x8xf32>
    %c0_2 = arith.constant 0 : index
    %c0_3 = arith.constant 0 : index
    %2 = vector.load %arg2[%c0_2, %c0_3] : memref<8x1xf32, #tpu.memory_space<vmem>>, vector<8x1xf32>
    %3 = vector.broadcast %2 : vector<8x1xf32> to vector<8x8xf32>
    %4 = arith.mulf %1, %3 : vector<8x8xf32>
    %c0_4 = arith.constant 0 : index
    %c0_5 = arith.constant 0 : index
    %5 = vector.load %arg3[%c0_4, %c0_5] : memref<8x1xf32, #tpu.memory_space<vmem>>, vector<8x1xf32>
    %6 = vector.broadcast %5 : vector<8x1xf32> to vector<8x8xf32>
    %7 = arith.addf %4, %6 : vector<8x8xf32>
    %cst = arith.constant 0.000000e+00 : f32
    %8 = vector.broadcast %cst : f32 to vector<8x8xf32>
    %9 = arith.maximumf %7, %8 : vector<8x8xf32>
    %c0_6 = arith.constant 0 : index
    %c0_7 = arith.constant 0 : index
    %c0_8 = arith.constant 0 : index
    %10 = vector.load %arg4[%c0_6, %c0_7, %c0_8] : memref<1x8x8xf32, #tpu.memory_space<vmem>>, vector<1x8x8xf32>
    %11 = vector.shape_cast %10 : vector<1x8x8xf32> to vector<8x8xf32>
    %12 = vector.shape_cast %9 : vector<8x8xf32> to vector<1x8x8xf32>
    tpu.vector_store %arg4[%c0_6, %c0_7, %c0_8], %12 {strides = array<i32>} : memref<1x8x8xf32, #tpu.memory_space<vmem>>, vector<1x8x8xf32>,
    return
  }
  func.func @transform_0(%arg0: i32) -> (i32, i32, i32) {
    %c0_i32 = arith.constant 0 : i32
    %c0_i32_0 = arith.constant 0 : i32
    %c0_i32_1 = arith.constant 0 : i32
    return %arg0, %c0_i32, %c0_i32_0 : i32, i32, i32
  }
  func.func @transform_1(%arg0: i32) -> (i32, i32) {
    %c0_i32 = arith.constant 0 : i32
    %c0_i32_0 = arith.constant 0 : i32
    %c0_i32_1 = arith.constant 0 : i32
    return %c0_i32, %c0_i32_0 : i32, i32
  }
  func.func @transform_2(%arg0: i32) -> (i32, i32) {
    %c0_i32 = arith.constant 0 : i32
    %c0_i32_0 = arith.constant 0 : i32
    %c0_i32_1 = arith.constant 0 : i32
    return %c0_i32, %c0_i32_0 : i32, i32
  }
  func.func @transform_3(%arg0: i32) -> (i32, i32, i32) {
    %c0_i32 = arith.constant 0 : i32
    %c0_i32_0 = arith.constant 0 : i32
    %c0_i32_1 = arith.constant 0 : i32
    return %arg0, %c0_i32, %c0_i32_0 : i32, i32, i32
  }
}

module attributes {stable_mosaic.version = 11 : i64} {
  func.func @_conv_layer_kernel(%arg0: i32, %arg1: memref<1x8x10xf32, #tpu.memory_space<vmem>>, %arg2: memref<3x8x8xf32, #tpu.memory_space<vmem>>, %arg3: memref<8x1xf32, #tpu.memory_space<vmem>>, %arg4: memref<8x1xf32, #tpu.memory_space<vmem>>, %arg5: memref<1x8x8xf32, #tpu.memory_space<vmem>>, %arg6: memref<1x8x2xf32, #tpu.memory_space<vmem>>) attributes {dimension_semantics = [#tpu.dimension_semantics<parallel>], iteration_bounds = array<i64: 2>, scalar_prefetch = 0 : i64, scratch_operands = 0 : i64, tpu.core_type = #tpu.core_type<tc>, window_params = [{transform_indices = @transform_0, window_bounds = array<i64: 1, 8, 10>}, {pipeline_mode = #tpu.pipeline_mode<synchronous>, transform_indices = @transform_1, window_bounds = array<i64: 3, 8, 8>}, {pipeline_mode = #tpu.pipeline_mode<synchronous>, transform_indices = @transform_2, window_bounds = array<i64: 8, 1>}, {pipeline_mode = #tpu.pipeline_mode<synchronous>, transform_indices = @transform_3, window_bounds = array<i64: 8, 1>}, {transform_indices = @transform_4, window_bounds = array<i64: 1, 8, 8>}, {transform_indices = @transform_5, window_bounds = array<i64: 1, 8, 2>}]} {
    %c0 = arith.constant 0 : index
    %c0_0 = arith.constant 0 : index
    %c0_1 = arith.constant 0 : index
    %0 = vector.load %arg1[%c0, %c0_0, %c0_1] : memref<1x8x10xf32, #tpu.memory_space<vmem>>, vector<1x8x10xf32>
    %1 = vector.shape_cast %0 : vector<1x8x10xf32> to vector<8x10xf32>
    %c0_2 = arith.constant 0 : index
    %c0_3 = arith.constant 0 : index
    %2 = vector.load %arg3[%c0_2, %c0_3] : memref<8x1xf32, #tpu.memory_space<vmem>>, vector<8x1xf32>
    %3 = vector.broadcast %2 : vector<8x1xf32> to vector<8x10xf32>
    %4 = arith.mulf %1, %3 : vector<8x10xf32>
    %c0_4 = arith.constant 0 : index
    %c0_5 = arith.constant 0 : index
    %5 = vector.load %arg4[%c0_4, %c0_5] : memref<8x1xf32, #tpu.memory_space<vmem>>, vector<8x1xf32>
    %6 = vector.broadcast %5 : vector<8x1xf32> to vector<8x10xf32>
    %7 = arith.addf %4, %6 : vector<8x10xf32>
    %cst = arith.constant 0.000000e+00 : f32
    %8 = vector.broadcast %cst : f32 to vector<8x10xf32>
    %9 = arith.maximumf %7, %8 : vector<8x10xf32>
    %10 = tpu.iota {dimensions = array<i32: 1>} : vector<8x10xi32>
    %c1_i32 = arith.constant 1 : i32
    %11 = vector.broadcast %c1_i32 : i32 to vector<8x10xi32>
    %12 = arith.cmpi sge, %10, %11 : vector<8x10xi32>
    %c8_i32 = arith.constant 8 : i32
    %13 = vector.broadcast %c8_i32 : i32 to vector<8x10xi32>
    %14 = arith.cmpi sle, %10, %13 : vector<8x10xi32>
    %15 = arith.andi %12, %14 : vector<8x10xi1>
    %cst_6 = arith.constant 0.000000e+00 : f32
    %16 = vector.broadcast %cst_6 : f32 to vector<8x10xf32>
    %17 = arith.select %15, %9, %16 : vector<8x10xi1>, vector<8x10xf32>
    %cst_7 = arith.constant 0.000000e+00 : f32
    %18 = vector.broadcast %cst_7 : f32 to vector<8x8xf32>
    %c0_8 = arith.constant 0 : index
    %c0_9 = arith.constant 0 : index
    %c0_10 = arith.constant 0 : index
    %19 = vector.load %arg2[%c0_8, %c0_9, %c0_10] : memref<3x8x8xf32, #tpu.memory_space<vmem>>, vector<1x8x8xf32>
    %20 = vector.shape_cast %19 : vector<1x8x8xf32> to vector<8x8xf32>
    %21 = vector.extract_strided_slice %17 {offsets = [0, 0], sizes = [8, 8], strides = [1, 1]} : vector<8x10xf32> to vector<8x8xf32>
    %cst_11 = arith.constant dense<0.000000e+00> : vector<8x8xf32>
    %22 = tpu.matmul %20, %21, %cst_11 {dimension_numbers = #tpu.dot_dimension_numbers<[1], [0], [0], [1], [0, 0, 1, 1], [], []>} : vector<8x8xf32>, vector<8x8xf32>, vector<8x8xf32> -> vector<8x8xf32>
    %23 = arith.addf %18, %22 : vector<8x8xf32>
    %c1 = arith.constant 1 : index
    %c0_12 = arith.constant 0 : index
    %c0_13 = arith.constant 0 : index
    %24 = vector.load %arg2[%c1, %c0_12, %c0_13] : memref<3x8x8xf32, #tpu.memory_space<vmem>>, vector<1x8x8xf32>
    %25 = vector.shape_cast %24 : vector<1x8x8xf32> to vector<8x8xf32>
    %26 = vector.extract_strided_slice %17 {offsets = [0, 1], sizes = [8, 8], strides = [1, 1]} : vector<8x10xf32> to vector<8x8xf32>
    %cst_14 = arith.constant dense<0.000000e+00> : vector<8x8xf32>
    %27 = tpu.matmul %25, %26, %cst_14 {dimension_numbers = #tpu.dot_dimension_numbers<[1], [0], [0], [1], [0, 0, 1, 1], [], []>} : vector<8x8xf32>, vector<8x8xf32>, vector<8x8xf32> -> vector<8x8xf32>
    %28 = arith.addf %23, %27 : vector<8x8xf32>
    %c2 = arith.constant 2 : index
    %c0_15 = arith.constant 0 : index
    %c0_16 = arith.constant 0 : index
    %29 = vector.load %arg2[%c2, %c0_15, %c0_16] : memref<3x8x8xf32, #tpu.memory_space<vmem>>, vector<1x8x8xf32>
    %30 = vector.shape_cast %29 : vector<1x8x8xf32> to vector<8x8xf32>
    %31 = vector.extract_strided_slice %17 {offsets = [0, 2], sizes = [8, 8], strides = [1, 1]} : vector<8x10xf32> to vector<8x8xf32>
    %cst_17 = arith.constant dense<0.000000e+00> : vector<8x8xf32>
    %32 = tpu.matmul %30, %31, %cst_17 {dimension_numbers = #tpu.dot_dimension_numbers<[1], [0], [0], [1], [0, 0, 1, 1], [], []>} : vector<8x8xf32>, vector<8x8xf32>, vector<8x8xf32> -> vector<8x8xf32>
    %33 = arith.addf %28, %32 : vector<8x8xf32>
    %c0_18 = arith.constant 0 : index
    %c0_19 = arith.constant 0 : index
    %c0_20 = arith.constant 0 : index
    %34 = vector.load %arg5[%c0_18, %c0_19, %c0_20] : memref<1x8x8xf32, #tpu.memory_space<vmem>>, vector<1x8x8xf32>
    %35 = vector.shape_cast %34 : vector<1x8x8xf32> to vector<8x8xf32>
    %36 = vector.shape_cast %33 : vector<8x8xf32> to vector<1x8x8xf32>
    tpu.vector_store %arg5[%c0_18, %c0_19, %c0_20], %36 {strides = array<i32>} : memref<1x8x8xf32, #tpu.memory_space<vmem>>, vector<1x8x8xf32>,
    %cst_21 = arith.constant dense<0.000000e+00> : vector<8xf32>
    %37 = vector.multi_reduction <add>, %33, %cst_21 [1] : vector<8x8xf32> to vector<8xf32>
    %38 = vector.shape_cast %37 : vector<8xf32> to vector<8x1xf32>
    %39 = arith.mulf %33, %33 : vector<8x8xf32>
    %cst_22 = arith.constant dense<0.000000e+00> : vector<8xf32>
    %40 = vector.multi_reduction <add>, %39, %cst_22 [1] : vector<8x8xf32> to vector<8xf32>
    %41 = vector.shape_cast %40 : vector<8xf32> to vector<8x1xf32>
    %42 = tpu.concatenate %38, %41 in 1 : vector<8x1xf32>, vector<8x1xf32> -> vector<8x2xf32>
    %c0_23 = arith.constant 0 : index
    %c0_24 = arith.constant 0 : index
    %c0_25 = arith.constant 0 : index
    %43 = vector.load %arg6[%c0_23, %c0_24, %c0_25] : memref<1x8x2xf32, #tpu.memory_space<vmem>>, vector<1x8x2xf32>
    %44 = vector.shape_cast %43 : vector<1x8x2xf32> to vector<8x2xf32>
    %45 = vector.shape_cast %42 : vector<8x2xf32> to vector<1x8x2xf32>
    tpu.vector_store %arg6[%c0_23, %c0_24, %c0_25], %45 {strides = array<i32>} : memref<1x8x2xf32, #tpu.memory_space<vmem>>, vector<1x8x2xf32>,
    return
  }
  func.func @transform_0(%arg0: i32) -> (i32, i32, i32) {
    %c0_i32 = arith.constant 0 : i32
    %c0_i32_0 = arith.constant 0 : i32
    %c0_i32_1 = arith.constant 0 : i32
    return %arg0, %c0_i32, %c0_i32_0 : i32, i32, i32
  }
  func.func @transform_1(%arg0: i32) -> (i32, i32, i32) {
    %c0_i32 = arith.constant 0 : i32
    %c0_i32_0 = arith.constant 0 : i32
    %c0_i32_1 = arith.constant 0 : i32
    %c0_i32_2 = arith.constant 0 : i32
    return %c0_i32, %c0_i32_0, %c0_i32_1 : i32, i32, i32
  }
  func.func @transform_2(%arg0: i32) -> (i32, i32) {
    %c0_i32 = arith.constant 0 : i32
    %c0_i32_0 = arith.constant 0 : i32
    %c0_i32_1 = arith.constant 0 : i32
    return %c0_i32, %c0_i32_0 : i32, i32
  }
  func.func @transform_3(%arg0: i32) -> (i32, i32) {
    %c0_i32 = arith.constant 0 : i32
    %c0_i32_0 = arith.constant 0 : i32
    %c0_i32_1 = arith.constant 0 : i32
    return %c0_i32, %c0_i32_0 : i32, i32
  }
  func.func @transform_4(%arg0: i32) -> (i32, i32, i32) {
    %c0_i32 = arith.constant 0 : i32
    %c0_i32_0 = arith.constant 0 : i32
    %c0_i32_1 = arith.constant 0 : i32
    return %arg0, %c0_i32, %c0_i32_0 : i32, i32, i32
  }
  func.func @transform_5(%arg0: i32) -> (i32, i32, i32) {
    %c0_i32 = arith.constant 0 : i32
    %c0_i32_0 = arith.constant 0 : i32
    %c0_i32_1 = arith.constant 0 : i32
    return %arg0, %c0_i32, %c0_i32_0 : i32, i32, i32
  }
}

</mosaic_0001>

<llo_original>
// kernel: conv_block_forward.5
$region0: #{conv_block_forward.5}
  #allocation0 [shape = 'u32[]', space=smem, size = 0x4, offset = 0x4, fixed_abs, tag = 'smem constant byte address 0x4 - core index']
  #allocation1 [shape = 'u32[72,128]{1,0:T(1,128)}', space=vmem, size = 0x9000, scoped, tag = 'internal scratch']
  %s0 = inlined_call_operand.vmem [shape: f32[2,8,8], index: 0, kind: input, shape index: {}]
  %s1 = inlined_call_operand.vmem [shape: f32[8,1], index: 1, kind: input, shape index: {}]
  %s2 = inlined_call_operand.vmem [shape: f32[8,1], index: 2, kind: input, shape index: {}]
  %s3 = inlined_call_operand.hbm [shape: f32[2,8,8], index: 3, kind: output, shape index: {}]
  %s4 = sld [smem:[#allocation0]]
  $region45: #{conv_block_forward.5} parent=0
    _
  %s6 = ssub.s32 1, %s4
  %s7 = scalar_select 0, %s6, %s4
  $region1: #{conv_block_forward.5} parent=0
    #allocation2 [shape = 'u8[8192]{0}', space=vmem, size = 0x2000, scoped, tag = 'output window, operand 0']
    #allocation3 [shape = 's32[2]{0}', space=sflag, size = 0x8, scoped, tag = 'scoped memory for conv_block_forward.5']
    %8 = vsyncpa [#allocation3], 0
    %s9 = scalar_lea.sflag [#allocation3], 1
    %10 = vsyncpa %s9, 0
    loop: start=0, step=1, limit=4
    $region2: #{conv_block_forward.5} parent=1 // loop_pre_header
      _
    $region3: #{conv_block_forward.5} parent=1 // loop_header
      %s12 = sphi 0, %s16
      %p13 = scmp.ge.s32.totalorder %s12, 4
      %s22 = sphi 0, %s24
      %s25 = sphi 0, %s22
      %s26 = sphi 0, %s25
      %s42 = sphi 0, %s26
      %s46 = sphi 0, %s46
      %s48 = sphi 0, %s46
      %s49 = sphi 0, %s48
      %s63 = sphi 0, %s49
      %s67 = sphi 0, %s67
      %s69 = sphi 0, %s67
      %s70 = sphi 0, %s69
      %s84 = sphi 0, %s70
      %s90 = sphi 0, %s92
      %s93 = sphi 0, %s90
      %s94 = sphi 0, %s93
      %s110 = sphi 0, %s94
    $region4: #{conv_block_forward.5} parent=1 // loop_header_branch
      %15 = sbr.rel (%p13) target = $region8
    $region5: #{conv_block_forward.5} parent=1 // loop_body
      %s17 = ssub.s32 %s12, 1
      %s18 = ssub.s32 %s12, 2
      %s19 = sadd.s32 %s12, 1
      %s20 = ssub.s32 %s12, %s19
      %p21 = scmp.eq.s32.totalorder %s20, 0
      %s23 = sadd.s32 %s22, 1
      %s24 = scalar_select %p21, %s22, %s23
      %p27 = pneg %p21
      %p28 = scmp.eq.s32.totalorder %s12, 1
      %p29 = por %p27, %p28
      %p30 = scmp.ne.s32.totalorder %s22, %s25
      %p31 = scmp.eq.s32.totalorder %s12, 0
      %p32 = por %p30, %p31
      %p33 = scmp.ne.s32.totalorder %s22, %s25
      %p34 = scmp.eq.s32.totalorder %s17, 1
      %p35 = por %p33, %p34
      %p36 = scmp.ne.s32.totalorder %s25, %s26
      %p37 = scmp.eq.s32.totalorder %s17, 0
      %p38 = por %p36, %p37
      %p39 = scmp.ne.s32.totalorder %s25, %s26
      %p40 = scmp.eq.s32.totalorder %s18, 1
      %p41 = por %p39, %p40
      %p43 = scmp.ne.s32.totalorder %s26, %s42
      %p44 = scmp.eq.s32.totalorder %s18, 0
      %p45 = por %p43, %p44
      %s47 = sadd.s32 %s46, 1
      %p50 = scmp.eq.s32.totalorder %s12, 1
      %p51 = scmp.ne.s32.totalorder %s46, %s48
      %p52 = scmp.eq.s32.totalorder %s12, 0
      %p53 = por %p51, %p52
      %p54 = scmp.ne.s32.totalorder %s46, %s48
      %p55 = scmp.eq.s32.totalorder %s17, 1
      %p56 = por %p54, %p55
      %p57 = scmp.ne.s32.totalorder %s48, %s49
      %p58 = scmp.eq.s32.totalorder %s17, 0
      %p59 = por %p57, %p58
      %p60 = scmp.ne.s32.totalorder %s48, %s49
      %p61 = scmp.eq.s32.totalorder %s18, 1
      %p62 = por %p60, %p61
      %p64 = scmp.ne.s32.totalorder %s49, %s63
      %p65 = scmp.eq.s32.totalorder %s18, 0
      %p66 = por %p64, %p65
      %s68 = sadd.s32 %s67, 1
      %p71 = scmp.eq.s32.totalorder %s12, 1
      %p72 = scmp.ne.s32.totalorder %s67, %s69
      %p73 = scmp.eq.s32.totalorder %s12, 0
      %p74 = por %p72, %p73
      %p75 = scmp.ne.s32.totalorder %s67, %s69
      %p76 = scmp.eq.s32.totalorder %s17, 1
      %p77 = por %p75, %p76
      %p78 = scmp.ne.s32.totalorder %s69, %s70
      %p79 = scmp.eq.s32.totalorder %s17, 0
      %p80 = por %p78, %p79
      %p81 = scmp.ne.s32.totalorder %s69, %s70
      %p82 = scmp.eq.s32.totalorder %s18, 1
      %p83 = por %p81, %p82
      %p85 = scmp.ne.s32.totalorder %s70, %s84
      %p86 = scmp.eq.s32.totalorder %s18, 0
      %p87 = por %p85, %p86
      %s88 = ssub.s32 %s12, %s19
      %p89 = scmp.eq.s32.totalorder %s88, 0
      %s91 = sadd.s32 %s90, 1
      %s92 = scalar_select %p89, %s90, %s91
      %p95 = pneg %p89
      %p96 = scmp.eq.s32.totalorder %s12, 1
      %p97 = por %p95, %p96
      %p98 = scmp.ne.s32.totalorder %s90, %s93
      %p99 = scmp.eq.s32.totalorder %s12, 0
      %p100 = por %p98, %p99
      %p101 = scmp.ne.s32.totalorder %s90, %s93
      %p102 = scmp.eq.s32.totalorder %s17, 1
      %p103 = por %p101, %p102
      %p104 = scmp.ne.s32.totalorder %s93, %s94
      %p105 = scmp.eq.s32.totalorder %s17, 0
      %p106 = por %p104, %p105
      %p107 = scmp.ne.s32.totalorder %s93, %s94
      %p108 = scmp.eq.s32.totalorder %s18, 1
      %p109 = por %p107, %p108
      %p111 = scmp.ne.s32.totalorder %s94, %s110
      %p112 = scmp.eq.s32.totalorder %s18, 0
      %p113 = por %p111, %p112
      %p114 = scmp.le.s32.totalorder 1, %s12
      %p115 = scmp.lt.s32.totalorder %s12, 3
      %p116 = pnand %p114, %p115
      %p117 = pneg %p116
      // Predicated region
      $region9: #{conv_block_forward.5} parent=5 // pred_check
        _
      $region10: #{conv_block_forward.5} parent=5 // pred_check_branch
        %119 = sbr.rel (%p116) target = $region12
      $region11: #{conv_block_forward.5} parent=5 // pred_region
        %s120 = ssub.s32 %s12, 1
        // Predicated region
        $region13: #{conv_block_forward.5} parent=11 // pred_check
          %p121 = pneg %p59
        $region14: #{conv_block_forward.5} parent=11 // pred_check_branch
          %123 = sbr.rel (%p121) target = $region16
        $region15: #{conv_block_forward.5} parent=11 // pred_region
          _
        $region16: #{conv_block_forward.5} parent=11 // pred_fallthru
          _
        // Predicated region
        $region17: #{conv_block_forward.5} parent=11 // pred_check
          %p124 = pneg %p80
        $region18: #{conv_block_forward.5} parent=11 // pred_check_branch
          %126 = sbr.rel (%p124) target = $region20
        $region19: #{conv_block_forward.5} parent=11 // pred_region
          _
        $region20: #{conv_block_forward.5} parent=11 // pred_fallthru
          _
      $region12: #{conv_block_forward.5} parent=5 // pred_fallthru
        _
      %p127 = scmp.lt.s32.totalorder %s12, 2
      // Predicated region
      $region21: #{conv_block_forward.5} parent=5 // pred_check
        %p128 = pneg %p127
      $region22: #{conv_block_forward.5} parent=5 // pred_check_branch
        %130 = sbr.rel (%p128) target = $region24
      $region23: #{conv_block_forward.5} parent=5 // pred_region
        // Predicated region
        $region25: #{conv_block_forward.5} parent=23 // pred_check
          %p131 = pneg %p32
        $region26: #{conv_block_forward.5} parent=23 // pred_check_branch
          %133 = sbr.rel (%p131) target = $region28
        $region27: #{conv_block_forward.5} parent=23 // pred_region
          %p134 = scmp.lt.s32.totalorder %s12, 1
          %s135 = scalar_select %p134, %s12, 1
          %s136 = smul.addr %s135, 8
          %s137 = scalar_lea.vmem %s0, %s136
        $region28: #{conv_block_forward.5} parent=23 // pred_fallthru
          _
      $region24: #{conv_block_forward.5} parent=5 // pred_fallthru
        _
      %p138 = scmp.le.s32.totalorder 1, %s12
      %p139 = scmp.lt.s32.totalorder %s12, 3
      %p140 = pnand %p138, %p139
      %p141 = pneg %p140
      // Predicated region
      $region29: #{conv_block_forward.5} parent=5 // pred_check
        _
      $region30: #{conv_block_forward.5} parent=5 // pred_check_branch
        %143 = sbr.rel (%p140) target = $region32
      $region31: #{conv_block_forward.5} parent=5 // pred_region
        %s144 = ssub.s32 %s12, 1
        %p145 = scmp.lt.s32.totalorder %s17, 1
        %s146 = scalar_select %p145, %s17, 1
        %s147 = smul.addr %s146, 8
        %s148 = scalar_lea.vmem %s0, %s147
        %p149 = pneg %p38
        %p150 = pneg %p35
        %p151 = pneg %p59
        %p152 = pneg %p56
        %p153 = pneg %p80
        %p154 = pneg %p77
        %p155 = pneg %p106
        %p156 = pneg %p103
        %s157 = sand.u32 %s93, 1
        %s158 = scalar_lea.sflag [#allocation3], %s157
        %s159 = sand.u32 %s93, 1
        %s160 = smul.addr %s159, 8
        %s161 = scalar_lea.vmem [#allocation2], %s160
        %p162 = scmp.lt.s32.totalorder %s17, 1
        %s163 = scalar_select %p162, %s17, 1
        %s164 = smul.addr %s163, 8
        %s165 = scalar_lea.vmem %s0, %s164
        %v166 = vld [vmem:[%s165] sm:$0xff]
        %v167 = vld [vmem:[%s1] sm:$0xff]
        %169 = vset.pattern.permute.xlu0 0
        %170 = vperm.xlu0 %169, %v167
        %v171 = vpop.permute.xlu0 %170
        %v173 = vmul.f32 %v166, %v171
        %v174 = vld [vmem:[%s2] sm:$0xff]
        %176 = vset.pattern.permute.xlu0 0
        %177 = vperm.xlu0 %176, %v174
        %v178 = vpop.permute.xlu0 %177
        %v180 = vadd.f32 %v173, %v178
        %v181 = vmax.f32 %v180, 0.0
        %vm182 = vcmask 64512
        %183 = vst.msk [vmem:[%s161] sm:$0xff] %vm182, %v181
        %s184 = sand.u32 %s93, 1
        %s185 = scalar_lea.sflag [#allocation3], %s184
        %s186 = sand.u32 %s93, 1
        %s187 = smul.addr %s186, 8
        %s188 = scalar_lea.vmem [#allocation2], %s187
        // Predicated region
        $region33: #{conv_block_forward.5} parent=31 // pred_check
          %p189 = pneg %p103
        $region34: #{conv_block_forward.5} parent=31 // pred_check_branch
          %191 = sbr.rel (%p189) target = $region36
        $region35: #{conv_block_forward.5} parent=31 // pred_region
          %193 = vsyncadd %s185, 0
          %s194 = smul.addr %s17, 8
          %s195 = scalar_lea.hbm %s3, %s194
          %s197 = sshll.u32 %s188, 4
          %s198 = int_to_ptr.vmem [resolvable:$true] %s197
          %s199 = sshll.u32 %s195, 4
          %s200 = int_to_ptr.hbm [resolvable:$true] %s199
          %202 = dma.vmem_to_hbm [thread:$0]  %s198, 128, %s200, %s185
        $region36: #{conv_block_forward.5} parent=31 // pred_fallthru
          _
      $region32: #{conv_block_forward.5} parent=5 // pred_fallthru
        _
      %p203 = scmp.le.s32.totalorder 2, %s12
      // Predicated region
      $region37: #{conv_block_forward.5} parent=5 // pred_check
        %p204 = pneg %p203
      $region38: #{conv_block_forward.5} parent=5 // pred_check_branch
        %206 = sbr.rel (%p204) target = $region40
      $region39: #{conv_block_forward.5} parent=5 // pred_region
        %s207 = ssub.s32 %s12, 2
        // Predicated region
        $region41: #{conv_block_forward.5} parent=39 // pred_check
          %p208 = pneg %p109
        $region42: #{conv_block_forward.5} parent=39 // pred_check_branch
          %210 = sbr.rel (%p208) target = $region44
        $region43: #{conv_block_forward.5} parent=39 // pred_region
          %s211 = sand.u32 %s94, 1
          %s212 = scalar_lea.sflag [#allocation3], %s211
          %s213 = sand.u32 %s94, 1
          %s214 = smul.addr %s213, 8
          %s215 = scalar_lea.vmem [#allocation2], %s214
          %217 = dma.done %s212, 128
        $region44: #{conv_block_forward.5} parent=39 // pred_fallthru
          _
      $region40: #{conv_block_forward.5} parent=5 // pred_fallthru
        _
    $region6: #{conv_block_forward.5} parent=1 // loop_footer
      %s16 = sadd.s32 1, %s12
    $region7: #{conv_block_forward.5} parent=1 // loop_footer_branch
      %11 = sbr.rel target = $region3
    $region8: #{conv_block_forward.5} parent=1 // loop_exit
      _
    %218 = vsyncpa [#allocation3], 1
    %s219 = scalar_lea.sflag [#allocation3], 1
    %220 = vsyncpa %s219, 1

// kernel: conv_block_forward.3
$region0: #{conv_block_forward.3}
  #allocation0 [shape = 'u32[]', space=smem, size = 0x4, offset = 0x4, fixed_abs, tag = 'smem constant byte address 0x4 - core index']
  #allocation1 [shape = 'u32[72,128]{1,0:T(1,128)}', space=vmem, size = 0x9000, scoped, tag = 'internal scratch']
  %s0 = inlined_call_operand.vmem [shape: f32[3,2,4,8], index: 0, kind: input, shape index: {}]
  %s1 = inlined_call_operand.vmem [shape: f32[3,8,4], index: 1, kind: input, shape index: {}]
  %s2 = inlined_call_operand.vmem [shape: f32[2,8,10], index: 2, kind: output, shape index: {0}]
  %s3 = inlined_call_operand.vmem [shape: f32[2,8,2], index: 3, kind: output, shape index: {1}]
  %4 = xla_tuple %s2, %s3
  %s5 = sld [smem:[#allocation0]]
  $region90: #{conv_block_forward.3} parent=0
    _
  %s7 = ssub.s32 1, %s5
  %s8 = scalar_select 0, %s7, %s5
  $region1: #{conv_block_forward.3} parent=0
    #allocation2 [shape = 'u8[12288]{0}', space=vmem, size = 0x3000, scoped, tag = 'input window, operand 0']
    loop: start=0, step=1, limit=4
    $region2: #{conv_block_forward.3} parent=1 // loop_pre_header
      _
    $region3: #{conv_block_forward.3} parent=1 // loop_header
      %s10 = sphi 0, %s14
      %p11 = scmp.ge.s32.totalorder %s10, 4
      %s20 = sphi 0, %s22
      %s23 = sphi 0, %s20
      %s24 = sphi 0, %s23
      %s40 = sphi 0, %s24
      %s44 = sphi 0, %s44
      %s46 = sphi 0, %s44
      %s47 = sphi 0, %s46
      %s61 = sphi 0, %s47
      %s67 = sphi 0, %s69
      %s70 = sphi 0, %s67
      %s71 = sphi 0, %s70
      %s87 = sphi 0, %s71
      %s93 = sphi 0, %s95
      %s96 = sphi 0, %s93
      %s97 = sphi 0, %s96
      %s113 = sphi 0, %s97
    $region4: #{conv_block_forward.3} parent=1 // loop_header_branch
      %13 = sbr.rel (%p11) target = $region8
    $region5: #{conv_block_forward.3} parent=1 // loop_body
      %s15 = ssub.s32 %s10, 1
      %s16 = ssub.s32 %s10, 2
      %s17 = sadd.s32 %s10, 1
      %s18 = ssub.s32 %s10, %s17
      %p19 = scmp.eq.s32.totalorder %s18, 0
      %s21 = sadd.s32 %s20, 1
      %s22 = scalar_select %p19, %s20, %s21
      %p25 = pneg %p19
      %p26 = scmp.eq.s32.totalorder %s10, 1
      %p27 = por %p25, %p26
      %p28 = scmp.ne.s32.totalorder %s20, %s23
      %p29 = scmp.eq.s32.totalorder %s10, 0
      %p30 = por %p28, %p29
      %p31 = scmp.ne.s32.totalorder %s20, %s23
      %p32 = scmp.eq.s32.totalorder %s15, 1
      %p33 = por %p31, %p32
      %p34 = scmp.ne.s32.totalorder %s23, %s24
      %p35 = scmp.eq.s32.totalorder %s15, 0
      %p36 = por %p34, %p35
      %p37 = scmp.ne.s32.totalorder %s23, %s24
      %p38 = scmp.eq.s32.totalorder %s16, 1
      %p39 = por %p37, %p38
      %p41 = scmp.ne.s32.totalorder %s24, %s40
      %p42 = scmp.eq.s32.totalorder %s16, 0
      %p43 = por %p41, %p42
      %s45 = sadd.s32 %s44, 1
      %p48 = scmp.eq.s32.totalorder %s10, 1
      %p49 = scmp.ne.s32.totalorder %s44, %s46
      %p50 = scmp.eq.s32.totalorder %s10, 0
      %p51 = por %p49, %p50
      %p52 = scmp.ne.s32.totalorder %s44, %s46
      %p53 = scmp.eq.s32.totalorder %s15, 1
      %p54 = por %p52, %p53
      %p55 = scmp.ne.s32.totalorder %s46, %s47
      %p56 = scmp.eq.s32.totalorder %s15, 0
      %p57 = por %p55, %p56
      %p58 = scmp.ne.s32.totalorder %s46, %s47
      %p59 = scmp.eq.s32.totalorder %s16, 1
      %p60 = por %p58, %p59
      %p62 = scmp.ne.s32.totalorder %s47, %s61
      %p63 = scmp.eq.s32.totalorder %s16, 0
      %p64 = por %p62, %p63
      %s65 = ssub.s32 %s10, %s17
      %p66 = scmp.eq.s32.totalorder %s65, 0
      %s68 = sadd.s32 %s67, 1
      %s69 = scalar_select %p66, %s67, %s68
      %p72 = pneg %p66
      %p73 = scmp.eq.s32.totalorder %s10, 1
      %p74 = por %p72, %p73
      %p75 = scmp.ne.s32.totalorder %s67, %s70
      %p76 = scmp.eq.s32.totalorder %s10, 0
      %p77 = por %p75, %p76
      %p78 = scmp.ne.s32.totalorder %s67, %s70
      %p79 = scmp.eq.s32.totalorder %s15, 1
      %p80 = por %p78, %p79
      %p81 = scmp.ne.s32.totalorder %s70, %s71
      %p82 = scmp.eq.s32.totalorder %s15, 0
      %p83 = por %p81, %p82
      %p84 = scmp.ne.s32.totalorder %s70, %s71
      %p85 = scmp.eq.s32.totalorder %s16, 1
      %p86 = por %p84, %p85
      %p88 = scmp.ne.s32.totalorder %s71, %s87
      %p89 = scmp.eq.s32.totalorder %s16, 0
      %p90 = por %p88, %p89
      %s91 = ssub.s32 %s10, %s17
      %p92 = scmp.eq.s32.totalorder %s91, 0
      %s94 = sadd.s32 %s93, 1
      %s95 = scalar_select %p92, %s93, %s94
      %p98 = pneg %p92
      %p99 = scmp.eq.s32.totalorder %s10, 1
      %p100 = por %p98, %p99
      %p101 = scmp.ne.s32.totalorder %s93, %s96
      %p102 = scmp.eq.s32.totalorder %s10, 0
      %p103 = por %p101, %p102
      %p104 = scmp.ne.s32.totalorder %s93, %s96
      %p105 = scmp.eq.s32.totalorder %s15, 1
      %p106 = por %p104, %p105
      %p107 = scmp.ne.s32.totalorder %s96, %s97
      %p108 = scmp.eq.s32.totalorder %s15, 0
      %p109 = por %p107, %p108
      %p110 = scmp.ne.s32.totalorder %s96, %s97
      %p111 = scmp.eq.s32.totalorder %s16, 1
      %p112 = por %p110, %p111
      %p114 = scmp.ne.s32.totalorder %s97, %s113
      %p115 = scmp.eq.s32.totalorder %s16, 0
      %p116 = por %p114, %p115
      %p117 = scmp.le.s32.totalorder 1, %s10
      %p118 = scmp.lt.s32.totalorder %s10, 3
      %p119 = pnand %p117, %p118
      %p120 = pneg %p119
      // Predicated region
      $region9: #{conv_block_forward.3} parent=5 // pred_check
        _
      $region10: #{conv_block_forward.3} parent=5 // pred_check_branch
        %122 = sbr.rel (%p119) target = $region12
      $region11: #{conv_block_forward.3} parent=5 // pred_region
        %s123 = ssub.s32 %s10, 1
        // Predicated region
        $region13: #{conv_block_forward.3} parent=11 // pred_check
          %p124 = pneg %p57
        $region14: #{conv_block_forward.3} parent=11 // pred_check_branch
          %126 = sbr.rel (%p124) target = $region16
        $region15: #{conv_block_forward.3} parent=11 // pred_region
          _
        $region16: #{conv_block_forward.3} parent=11 // pred_fallthru
          _
      $region12: #{conv_block_forward.3} parent=5 // pred_fallthru
        _
      %p127 = scmp.lt.s32.totalorder %s10, 2
      // Predicated region
      $region17: #{conv_block_forward.3} parent=5 // pred_check
        %p128 = pneg %p127
      $region18: #{conv_block_forward.3} parent=5 // pred_check_branch
        %130 = sbr.rel (%p128) target = $region20
      $region19: #{conv_block_forward.3} parent=5 // pred_region
        // Predicated region
        $region21: #{conv_block_forward.3} parent=19 // pred_check
          %p131 = pneg %p30
        $region22: #{conv_block_forward.3} parent=19 // pred_check_branch
          %133 = sbr.rel (%p131) target = $region24
        $region23: #{conv_block_forward.3} parent=19 // pred_region
          %s134 = sand.u32 %s20, 1
          %s135 = sand.u32 %s20, 1
          %s136 = smul.addr %s135, 12
          %s137 = scalar_lea.vmem [#allocation2], %s136
          %s138 = smul.addr %s10, 4
          %s139 = scalar_lea.vmem %s0, %s138
          // Predicated region
          $region25: #{conv_block_forward.3} parent=23 // pred_check
            _
          $region26: #{conv_block_forward.3} parent=23 // pred_check_branch
            %141 = sbr.rel (0) target = $region28
          $region27: #{conv_block_forward.3} parent=23 // pred_region
            // Predicated region
            $region29: #{conv_block_forward.3} parent=27 // pred_check
              _
            $region30: #{conv_block_forward.3} parent=27 // pred_check_branch
              %143 = sbr.rel target = $region32
            $region31: #{conv_block_forward.3} parent=27 // pred_region
              // Predicated region
              $region44: #{conv_block_forward.3} parent=31 // pred_check
                _
              $region45: #{conv_block_forward.3} parent=31 // pred_check_branch
                %163 = sbr.rel (0) target = $region47
              $region46: #{conv_block_forward.3} parent=31 // pred_region
                loop: start=0, step=1, limit=1
                $region48: #{conv_block_forward.3} parent=46 // loop_pre_header
                  _
                $region49: #{conv_block_forward.3} parent=46 // loop_header
                  %s165 = sphi 0, %s169
                  %p166 = scmp.ge.s32.totalorder %s165, 1
                  %s170 = sphi %s139, %s139
                  %s171 = sphi %s137, %s137
                $region50: #{conv_block_forward.3} parent=46 // loop_header_branch
                  %168 = sbr.rel (%p166) target = $region54
                $region51: #{conv_block_forward.3} parent=46 // loop_body
                  _
                $region52: #{conv_block_forward.3} parent=46 // loop_footer
                  %s169 = sadd.s32 1, %s165
                $region53: #{conv_block_forward.3} parent=46 // loop_footer_branch
                  %164 = sbr.rel target = $region49
                $region54: #{conv_block_forward.3} parent=46 // loop_exit
                  _
                %s173 = ssub.s32 16, 1
                loop: start=0, step=1, limit=1
                $region55: #{conv_block_forward.3} parent=46 // loop_pre_header
                  _
                $region56: #{conv_block_forward.3} parent=46 // loop_header
                  %s175 = sphi 0, %s179
                  %p176 = scmp.ge.s32.totalorder %s175, 1
                  %s180 = sphi %s139, %s139
                  %s181 = sphi %s137, %s137
                $region57: #{conv_block_forward.3} parent=46 // loop_header_branch
                  %178 = sbr.rel (%p176) target = $region61
                $region58: #{conv_block_forward.3} parent=46 // loop_body
                  %v182 = vld [vmem:[%s180] sm:%s173]
                  %183 = vst [vmem:[%s181] sm:%s173] %v182
                  %v184 = vld [vmem:[%s180 + $0x8] sm:%s173]
                  %185 = vst [vmem:[%s181 + $0x4] sm:%s173] %v184
                  %v186 = vld [vmem:[%s180 + $0x10] sm:%s173]
                  %187 = vst [vmem:[%s181 + $0x8] sm:%s173] %v186
                $region59: #{conv_block_forward.3} parent=46 // loop_footer
                  %s179 = sadd.s32 1, %s175
                $region60: #{conv_block_forward.3} parent=46 // loop_footer_branch
                  %174 = sbr.rel target = $region56
                $region61: #{conv_block_forward.3} parent=46 // loop_exit
                  _
              $region47: #{conv_block_forward.3} parent=31 // pred_fallthru
                _
            $region32: #{conv_block_forward.3} parent=27 // pred_fallthru
              _
            // Predicated region
            $region33: #{conv_block_forward.3} parent=27 // pred_check
              _
            $region34: #{conv_block_forward.3} parent=27 // pred_check_branch
              %145 = sbr.rel (0) target = $region36
            $region35: #{conv_block_forward.3} parent=27 // pred_region
              %s147 = ssub.s32 16, 1
              loop: start=0, step=1, limit=1
              $region37: #{conv_block_forward.3} parent=35 // loop_pre_header
                _
              $region38: #{conv_block_forward.3} parent=35 // loop_header
                %s149 = sphi 0, %s153
                %p150 = scmp.ge.s32.totalorder %s149, 1
                %s154 = sphi %s139, %s139
                %s155 = sphi %s137, %s137
              $region39: #{conv_block_forward.3} parent=35 // loop_header_branch
                %152 = sbr.rel (%p150) target = $region43
              $region40: #{conv_block_forward.3} parent=35 // loop_body
                %v156 = vld [vmem:[%s154] sm:%s147]
                %157 = vst [vmem:[%s155] sm:%s147] %v156
                %v158 = vld [vmem:[%s154 + $0x8] sm:%s147]
                %159 = vst [vmem:[%s155 + $0x4] sm:%s147] %v158
                %v160 = vld [vmem:[%s154 + $0x10] sm:%s147]
                %161 = vst [vmem:[%s155 + $0x8] sm:%s147] %v160
              $region41: #{conv_block_forward.3} parent=35 // loop_footer
                %s153 = sadd.s32 1, %s149
              $region42: #{conv_block_forward.3} parent=35 // loop_footer_branch
                %148 = sbr.rel target = $region38
              $region43: #{conv_block_forward.3} parent=35 // loop_exit
                _
            $region36: #{conv_block_forward.3} parent=27 // pred_fallthru
              _
          $region28: #{conv_block_forward.3} parent=23 // pred_fallthru
            _
          %188 = vnop
        $region24: #{conv_block_forward.3} parent=19 // pred_fallthru
          _
      $region20: #{conv_block_forward.3} parent=5 // pred_fallthru
        _
      %p189 = scmp.le.s32.totalorder 1, %s10
      %p190 = scmp.lt.s32.totalorder %s10, 3
      %p191 = pnand %p189, %p190
      %p192 = pneg %p191
      // Predicated region
      $region62: #{conv_block_forward.3} parent=5 // pred_check
        _
      $region63: #{conv_block_forward.3} parent=5 // pred_check_branch
        %194 = sbr.rel (%p191) target = $region65
      $region64: #{conv_block_forward.3} parent=5 // pred_region
        %s195 = ssub.s32 %s10, 1
        %s196 = sand.u32 %s23, 1
        %s197 = sand.u32 %s23, 1
        %s198 = smul.addr %s197, 12
        %s199 = scalar_lea.vmem [#allocation2], %s198
        // Predicated region
        $region66: #{conv_block_forward.3} parent=64 // pred_check
          %p200 = pneg %p36
        $region67: #{conv_block_forward.3} parent=64 // pred_check_branch
          %202 = sbr.rel (%p200) target = $region69
        $region68: #{conv_block_forward.3} parent=64 // pred_region
          _
        $region69: #{conv_block_forward.3} parent=64 // pred_fallthru
          _
        %s203 = sand.u32 %s23, 1
        %s204 = sand.u32 %s23, 1
        %s205 = smul.addr %s204, 12
        %s206 = scalar_lea.vmem [#allocation2], %s205
        %p207 = pneg %p36
        %p208 = pneg %p33
        %p209 = pneg %p57
        %p210 = pneg %p54
        %p211 = pneg %p83
        %p212 = pneg %p80
        %p213 = scmp.lt.s32.totalorder %s15, 1
        %s214 = scalar_select %p213, %s15, 1
        %s215 = smul.addr %s214, 8
        %s216 = scalar_lea.vmem %s2, %s215
        %p217 = pneg %p109
        %p218 = pneg %p106
        %p219 = scmp.lt.s32.totalorder %s15, 1
        %s220 = scalar_select %p219, %s15, 1
        %s221 = smul.addr %s220, 8
        %s222 = scalar_lea.vmem %s3, %s221
        %p223 = scmp.lt.s32.totalorder %s15, 1
        %s224 = scalar_select %p223, %s15, 1
        %s225 = smul.addr %s224, 8
        %s226 = scalar_lea.vmem %s2, %s225
        %p227 = scmp.lt.s32.totalorder %s15, 1
        %s228 = scalar_select %p227, %s15, 1
        %s229 = smul.addr %s228, 8
        %s230 = scalar_lea.vmem %s3, %s229
        %v231 = vld [vmem:[%s1] sm:$0xff]
        %v232 = vld [vmem:[%s199] sm:$0xf]
        %s233 = scalar_lea.vmem %s1, 8
        %v234 = vld [vmem:[%s233] sm:$0xff]
        %s235 = scalar_lea.vmem %s199, 4 [#allocation2]
        %v236 = vld [vmem:[%s235] sm:$0xf]
        %vm237 = vcmask 31744
        %v239 = vsel %vm237, %v234, 0
        %vm241 = vcmask 1043456
        %v243 = vsel %vm241, %v236, 0
        %245 = vmatpush.msra.mxu0 0.0
        %246 = vmatpush.msra.mxu0 0.0
        %247 = vmatpush.msra.mxu0 0.0
        %248 = vmatpush.msra.mxu0 0.0
        %249 = vmatpush.msra.mxu0 0.0
        %250 = vmatpush.msra.mxu0 0.0
        %251 = vmatpush.msra.mxu0 0.0
        %252 = vmatpush.msra.mxu0 0.0
        %253 = vmatpush.msra.mxu0 0.0
        %254 = vmatpush.msra.mxu0 0.0
        %255 = vmatpush.msra.mxu0 0.0
        %256 = vmatpush.msra.mxu0 0.0
        %257 = vmatpush.msra.mxu0 0.0
        %258 = vmatpush.msra.mxu0 0.0
        %259 = vmatpush.msra.mxu0 0.0
        %260 = vmatpush.msra.mxu0 %v243
        %261 = vmatmul.f32.gmra.mxu0 %v239
        %v262 = vpop.f32.mrf.mxu0
        %v263 = vadd.f32 0.0, %v262
        %264 = vdwg.mxu0
        %v266 = vsel %vm237, %v231, 0
        %v269 = vsel %vm241, %v232, 0
        %271 = vmatpush.msra.mxu0 0.0
        %272 = vmatpush.msra.mxu0 0.0
        %273 = vmatpush.msra.mxu0 0.0
        %274 = vmatpush.msra.mxu0 0.0
        %275 = vmatpush.msra.mxu0 0.0
        %276 = vmatpush.msra.mxu0 0.0
        %277 = vmatpush.msra.mxu0 0.0
        %278 = vmatpush.msra.mxu0 0.0
        %279 = vmatpush.msra.mxu0 0.0
        %280 = vmatpush.msra.mxu0 0.0
        %281 = vmatpush.msra.mxu0 0.0
        %282 = vmatpush.msra.mxu0 0.0
        %283 = vmatpush.msra.mxu0 0.0
        %284 = vmatpush.msra.mxu0 0.0
        %285 = vmatpush.msra.mxu0 0.0
        %286 = vmatpush.msra.mxu0 %v269
        %287 = vmatmul.f32.gmra.mxu0 %v266
        %v288 = vpop.f32.mrf.mxu0
        %v289 = vadd.f32 %v263, %v288
        %290 = vdwg.mxu0
        %s291 = scalar_lea.vmem %s1, 16
        %v292 = vld [vmem:[%s291] sm:$0xff]
        %s293 = scalar_lea.vmem %s199, 8 [#allocation2]
        %v294 = vld [vmem:[%s293] sm:$0xf]
        %v296 = vsel %vm237, %v292, 0
        %v299 = vsel %vm241, %v294, 0
        %301 = vmatpush.msra.mxu0 0.0
        %302 = vmatpush.msra.mxu0 0.0
        %303 = vmatpush.msra.mxu0 0.0
        %304 = vmatpush.msra.mxu0 0.0
        %305 = vmatpush.msra.mxu0 0.0
        %306 = vmatpush.msra.mxu0 0.0
        %307 = vmatpush.msra.mxu0 0.0
        %308 = vmatpush.msra.mxu0 0.0
        %309 = vmatpush.msra.mxu0 0.0
        %310 = vmatpush.msra.mxu0 0.0
        %311 = vmatpush.msra.mxu0 0.0
        %312 = vmatpush.msra.mxu0 0.0
        %313 = vmatpush.msra.mxu0 0.0
        %314 = vmatpush.msra.mxu0 0.0
        %315 = vmatpush.msra.mxu0 0.0
        %316 = vmatpush.msra.mxu0 %v299
        %317 = vmatmul.f32.gmra.mxu0 %v296
        %v318 = vpop.f32.mrf.mxu0
        %v319 = vadd.f32 0.0, %v318
        %320 = vdwg.mxu0
        %v321 = vadd.f32 %v289, %v319
        %323 = vrot.lane.b32.xlu0 %v321, 1
        %v324 = vpop.permute.xlu0 %323
        %vm326 = vcmask 7168
        %v327 = vsel %vm326, 0.0, %v324
        %vm328 = vcmask 72704
        %v329 = vsel %vm328, %v327, 0.0
        %vm330 = vcmask 80896
        %331 = vst.msk [vmem:[%s226] sm:$0xff] %vm330, %v329
        %vm332 = vcmask 64512
        %v333 = vsel %vm332, %v321, 0.0
        %334 = vadd.xlane.f32.xlu0 %v333
        %v335 = vpop.xlane.xlu0 %334
        %v336 = vmul.f32 %v321, %v321
        %v337 = vsel %vm332, %v336, 0.0
        %338 = vadd.xlane.f32.xlu0 %v337
        %v339 = vpop.xlane.xlu0 %338
        %v340 = vsel %vm326, %v335, %v339
        %vm341 = vcmask 15360
        %342 = vst.msk [vmem:[%s230] sm:$0xff] %vm341, %v340
        %p343 = scmp.lt.s32.totalorder %s15, 1
        %s344 = scalar_select %p343, %s15, 1
        %s345 = smul.addr %s344, 8
        %s346 = scalar_lea.vmem %s2, %s345
        %p347 = scmp.lt.s32.totalorder %s15, 1
        %s348 = scalar_select %p347, %s15, 1
        %s349 = smul.addr %s348, 8
        %s350 = scalar_lea.vmem %s3, %s349
        // Predicated region
        $region70: #{conv_block_forward.3} parent=64 // pred_check
          %p351 = pneg %p80
        $region71: #{conv_block_forward.3} parent=64 // pred_check_branch
          %353 = sbr.rel (%p351) target = $region73
        $region72: #{conv_block_forward.3} parent=64 // pred_region
          _
        $region73: #{conv_block_forward.3} parent=64 // pred_fallthru
          _
        // Predicated region
        $region74: #{conv_block_forward.3} parent=64 // pred_check
          %p354 = pneg %p106
        $region75: #{conv_block_forward.3} parent=64 // pred_check_branch
          %356 = sbr.rel (%p354) target = $region77
        $region76: #{conv_block_forward.3} parent=64 // pred_region
          _
        $region77: #{conv_block_forward.3} parent=64 // pred_fallthru
          _
      $region65: #{conv_block_forward.3} parent=5 // pred_fallthru
        _
      %p357 = scmp.le.s32.totalorder 2, %s10
      // Predicated region
      $region78: #{conv_block_forward.3} parent=5 // pred_check
        %p358 = pneg %p357
      $region79: #{conv_block_forward.3} parent=5 // pred_check_branch
        %360 = sbr.rel (%p358) target = $region81
      $region80: #{conv_block_forward.3} parent=5 // pred_region
        %s361 = ssub.s32 %s10, 2
        // Predicated region
        $region82: #{conv_block_forward.3} parent=80 // pred_check
          %p362 = pneg %p86
        $region83: #{conv_block_forward.3} parent=80 // pred_check_branch
          %364 = sbr.rel (%p362) target = $region85
        $region84: #{conv_block_forward.3} parent=80 // pred_region
          %p365 = scmp.lt.s32.totalorder %s16, 1
          %s366 = scalar_select %p365, %s16, 1
          %s367 = smul.addr %s366, 8
          %s368 = scalar_lea.vmem %s2, %s367
        $region85: #{conv_block_forward.3} parent=80 // pred_fallthru
          _
        // Predicated region
        $region86: #{conv_block_forward.3} parent=80 // pred_check
          %p369 = pneg %p112
        $region87: #{conv_block_forward.3} parent=80 // pred_check_branch
          %371 = sbr.rel (%p369) target = $region89
        $region88: #{conv_block_forward.3} parent=80 // pred_region
          %p372 = scmp.lt.s32.totalorder %s16, 1
          %s373 = scalar_select %p372, %s16, 1
          %s374 = smul.addr %s373, 8
          %s375 = scalar_lea.vmem %s3, %s374
        $region89: #{conv_block_forward.3} parent=80 // pred_fallthru
          _
      $region81: #{conv_block_forward.3} parent=5 // pred_fallthru
        _
    $region6: #{conv_block_forward.3} parent=1 // loop_footer
      %s14 = sadd.s32 1, %s10
    $region7: #{conv_block_forward.3} parent=1 // loop_footer_branch
      %9 = sbr.rel target = $region3
    $region8: #{conv_block_forward.3} parent=1 // loop_exit
      _

// kernel: conv_block_forward.4
$region0: #{conv_block_forward.4}
  #allocation0 [shape = 'u32[]', space=smem, size = 0x4, offset = 0x4, fixed_abs, tag = 'smem constant byte address 0x4 - core index']
  #allocation1 [shape = 'u32[72,128]{1,0:T(1,128)}', space=vmem, size = 0x9000, scoped, tag = 'internal scratch']
  %s0 = inlined_call_operand.vmem [shape: f32[2,8,10], index: 0, kind: input, shape index: {}]
  %s1 = inlined_call_operand.vmem [shape: f32[3,8,8], index: 1, kind: input, shape index: {}]
  %s2 = inlined_call_operand.vmem [shape: f32[8,1], index: 2, kind: input, shape index: {}]
  %s3 = inlined_call_operand.vmem [shape: f32[8,1], index: 3, kind: input, shape index: {}]
  %s4 = inlined_call_operand.vmem [shape: f32[2,8,8], index: 4, kind: output, shape index: {0}]
  %s5 = inlined_call_operand.vmem [shape: f32[2,8,2], index: 5, kind: output, shape index: {1}]
  %6 = xla_tuple %s4, %s5
  %s7 = sld [smem:[#allocation0]]
  $region57: #{conv_block_forward.4} parent=0
    _
  %s9 = ssub.s32 1, %s7
  %s10 = scalar_select 0, %s9, %s7
  loop: start=0, step=1, limit=4
  $region2: #{conv_block_forward.4} parent=0 // loop_pre_header
    _
  $region3: #{conv_block_forward.4} parent=0 // loop_header
    %s12 = sphi 0, %s16
    %p13 = scmp.ge.s32.totalorder %s12, 4
    %s22 = sphi 0, %s24
    %s25 = sphi 0, %s22
    %s26 = sphi 0, %s25
    %s42 = sphi 0, %s26
    %s46 = sphi 0, %s46
    %s48 = sphi 0, %s46
    %s49 = sphi 0, %s48
    %s63 = sphi 0, %s49
    %s67 = sphi 0, %s67
    %s69 = sphi 0, %s67
    %s70 = sphi 0, %s69
    %s84 = sphi 0, %s70
    %s88 = sphi 0, %s88
    %s90 = sphi 0, %s88
    %s91 = sphi 0, %s90
    %s105 = sphi 0, %s91
    %s111 = sphi 0, %s113
    %s114 = sphi 0, %s111
    %s115 = sphi 0, %s114
    %s131 = sphi 0, %s115
    %s137 = sphi 0, %s139
    %s140 = sphi 0, %s137
    %s141 = sphi 0, %s140
    %s157 = sphi 0, %s141
  $region4: #{conv_block_forward.4} parent=0 // loop_header_branch
    %15 = sbr.rel (%p13) target = $region8
  $region5: #{conv_block_forward.4} parent=0 // loop_body
    %s17 = ssub.s32 %s12, 1
    %s18 = ssub.s32 %s12, 2
    %s19 = sadd.s32 %s12, 1
    %s20 = ssub.s32 %s12, %s19
    %p21 = scmp.eq.s32.totalorder %s20, 0
    %s23 = sadd.s32 %s22, 1
    %s24 = scalar_select %p21, %s22, %s23
    %p27 = pneg %p21
    %p28 = scmp.eq.s32.totalorder %s12, 1
    %p29 = por %p27, %p28
    %p30 = scmp.ne.s32.totalorder %s22, %s25
    %p31 = scmp.eq.s32.totalorder %s12, 0
    %p32 = por %p30, %p31
    %p33 = scmp.ne.s32.totalorder %s22, %s25
    %p34 = scmp.eq.s32.totalorder %s17, 1
    %p35 = por %p33, %p34
    %p36 = scmp.ne.s32.totalorder %s25, %s26
    %p37 = scmp.eq.s32.totalorder %s17, 0
    %p38 = por %p36, %p37
    %p39 = scmp.ne.s32.totalorder %s25, %s26
    %p40 = scmp.eq.s32.totalorder %s18, 1
    %p41 = por %p39, %p40
    %p43 = scmp.ne.s32.totalorder %s26, %s42
    %p44 = scmp.eq.s32.totalorder %s18, 0
    %p45 = por %p43, %p44
    %s47 = sadd.s32 %s46, 1
    %p50 = scmp.eq.s32.totalorder %s12, 1
    %p51 = scmp.ne.s32.totalorder %s46, %s48
    %p52 = scmp.eq.s32.totalorder %s12, 0
    %p53 = por %p51, %p52
    %p54 = scmp.ne.s32.totalorder %s46, %s48
    %p55 = scmp.eq.s32.totalorder %s17, 1
    %p56 = por %p54, %p55
    %p57 = scmp.ne.s32.totalorder %s48, %s49
    %p58 = scmp.eq.s32.totalorder %s17, 0
    %p59 = por %p57, %p58
    %p60 = scmp.ne.s32.totalorder %s48, %s49
    %p61 = scmp.eq.s32.totalorder %s18, 1
    %p62 = por %p60, %p61
    %p64 = scmp.ne.s32.totalorder %s49, %s63
    %p65 = scmp.eq.s32.totalorder %s18, 0
    %p66 = por %p64, %p65
    %s68 = sadd.s32 %s67, 1
    %p71 = scmp.eq.s32.totalorder %s12, 1
    %p72 = scmp.ne.s32.totalorder %s67, %s69
    %p73 = scmp.eq.s32.totalorder %s12, 0
    %p74 = por %p72, %p73
    %p75 = scmp.ne.s32.totalorder %s67, %s69
    %p76 = scmp.eq.s32.totalorder %s17, 1
    %p77 = por %p75, %p76
    %p78 = scmp.ne.s32.totalorder %s69, %s70
    %p79 = scmp.eq.s32.totalorder %s17, 0
    %p80 = por %p78, %p79
    %p81 = scmp.ne.s32.totalorder %s69, %s70
    %p82 = scmp.eq.s32.totalorder %s18, 1
    %p83 = por %p81, %p82
    %p85 = scmp.ne.s32.totalorder %s70, %s84
    %p86 = scmp.eq.s32.totalorder %s18, 0
    %p87 = por %p85, %p86
    %s89 = sadd.s32 %s88, 1
    %p92 = scmp.eq.s32.totalorder %s12, 1
    %p93 = scmp.ne.s32.totalorder %s88, %s90
    %p94 = scmp.eq.s32.totalorder %s12, 0
    %p95 = por %p93, %p94
    %p96 = scmp.ne.s32.totalorder %s88, %s90
    %p97 = scmp.eq.s32.totalorder %s17, 1
    %p98 = por %p96, %p97
    %p99 = scmp.ne.s32.totalorder %s90, %s91
    %p100 = scmp.eq.s32.totalorder %s17, 0
    %p101 = por %p99, %p100
    %p102 = scmp.ne.s32.totalorder %s90, %s91
    %p103 = scmp.eq.s32.totalorder %s18, 1
    %p104 = por %p102, %p103
    %p106 = scmp.ne.s32.totalorder %s91, %s105
    %p107 = scmp.eq.s32.totalorder %s18, 0
    %p108 = por %p106, %p107
    %s109 = ssub.s32 %s12, %s19
    %p110 = scmp.eq.s32.totalorder %s109, 0
    %s112 = sadd.s32 %s111, 1
    %s113 = scalar_select %p110, %s111, %s112
    %p116 = pneg %p110
    %p117 = scmp.eq.s32.totalorder %s12, 1
    %p118 = por %p116, %p117
    %p119 = scmp.ne.s32.totalorder %s111, %s114
    %p120 = scmp.eq.s32.totalorder %s12, 0
    %p121 = por %p119, %p120
    %p122 = scmp.ne.s32.totalorder %s111, %s114
    %p123 = scmp.eq.s32.totalorder %s17, 1
    %p124 = por %p122, %p123
    %p125 = scmp.ne.s32.totalorder %s114, %s115
    %p126 = scmp.eq.s32.totalorder %s17, 0
    %p127 = por %p125, %p126
    %p128 = scmp.ne.s32.totalorder %s114, %s115
    %p129 = scmp.eq.s32.totalorder %s18, 1
    %p130 = por %p128, %p129
    %p132 = scmp.ne.s32.totalorder %s115, %s131
    %p133 = scmp.eq.s32.totalorder %s18, 0
    %p134 = por %p132, %p133
    %s135 = ssub.s32 %s12, %s19
    %p136 = scmp.eq.s32.totalorder %s135, 0
    %s138 = sadd.s32 %s137, 1
    %s139 = scalar_select %p136, %s137, %s138
    %p142 = pneg %p136
    %p143 = scmp.eq.s32.totalorder %s12, 1
    %p144 = por %p142, %p143
    %p145 = scmp.ne.s32.totalorder %s137, %s140
    %p146 = scmp.eq.s32.totalorder %s12, 0
    %p147 = por %p145, %p146
    %p148 = scmp.ne.s32.totalorder %s137, %s140
    %p149 = scmp.eq.s32.totalorder %s17, 1
    %p150 = por %p148, %p149
    %p151 = scmp.ne.s32.totalorder %s140, %s141
    %p152 = scmp.eq.s32.totalorder %s17, 0
    %p153 = por %p151, %p152
    %p154 = scmp.ne.s32.totalorder %s140, %s141
    %p155 = scmp.eq.s32.totalorder %s18, 1
    %p156 = por %p154, %p155
    %p158 = scmp.ne.s32.totalorder %s141, %s157
    %p159 = scmp.eq.s32.totalorder %s18, 0
    %p160 = por %p158, %p159
    %p161 = scmp.le.s32.totalorder 1, %s12
    %p162 = scmp.lt.s32.totalorder %s12, 3
    %p163 = pnand %p161, %p162
    %p164 = pneg %p163
    // Predicated region
    $region9: #{conv_block_forward.4} parent=5 // pred_check
      _
    $region10: #{conv_block_forward.4} parent=5 // pred_check_branch
      %166 = sbr.rel (%p163) target = $region12
    $region11: #{conv_block_forward.4} parent=5 // pred_region
      %s167 = ssub.s32 %s12, 1
      // Predicated region
      $region13: #{conv_block_forward.4} parent=11 // pred_check
        %p168 = pneg %p59
      $region14: #{conv_block_forward.4} parent=11 // pred_check_branch
        %170 = sbr.rel (%p168) target = $region16
      $region15: #{conv_block_forward.4} parent=11 // pred_region
        _
      $region16: #{conv_block_forward.4} parent=11 // pred_fallthru
        _
      // Predicated region
      $region17: #{conv_block_forward.4} parent=11 // pred_check
        %p171 = pneg %p80
      $region18: #{conv_block_forward.4} parent=11 // pred_check_branch
        %173 = sbr.rel (%p171) target = $region20
      $region19: #{conv_block_forward.4} parent=11 // pred_region
        _
      $region20: #{conv_block_forward.4} parent=11 // pred_fallthru
        _
      // Predicated region
      $region21: #{conv_block_forward.4} parent=11 // pred_check
        %p174 = pneg %p101
      $region22: #{conv_block_forward.4} parent=11 // pred_check_branch
        %176 = sbr.rel (%p174) target = $region24
      $region23: #{conv_block_forward.4} parent=11 // pred_region
        _
      $region24: #{conv_block_forward.4} parent=11 // pred_fallthru
        _
    $region12: #{conv_block_forward.4} parent=5 // pred_fallthru
      _
    %p177 = scmp.lt.s32.totalorder %s12, 2
    // Predicated region
    $region25: #{conv_block_forward.4} parent=5 // pred_check
      %p178 = pneg %p177
    $region26: #{conv_block_forward.4} parent=5 // pred_check_branch
      %180 = sbr.rel (%p178) target = $region28
    $region27: #{conv_block_forward.4} parent=5 // pred_region
      // Predicated region
      $region29: #{conv_block_forward.4} parent=27 // pred_check
        %p181 = pneg %p32
      $region30: #{conv_block_forward.4} parent=27 // pred_check_branch
        %183 = sbr.rel (%p181) target = $region32
      $region31: #{conv_block_forward.4} parent=27 // pred_region
        %p184 = scmp.lt.s32.totalorder %s12, 1
        %s185 = scalar_select %p184, %s12, 1
        %s186 = smul.addr %s185, 8
        %s187 = scalar_lea.vmem %s0, %s186
      $region32: #{conv_block_forward.4} parent=27 // pred_fallthru
        _
    $region28: #{conv_block_forward.4} parent=5 // pred_fallthru
      _
    %p188 = scmp.le.s32.totalorder 1, %s12
    %p189 = scmp.lt.s32.totalorder %s12, 3
    %p190 = pnand %p188, %p189
    %p191 = pneg %p190
    // Predicated region
    $region33: #{conv_block_forward.4} parent=5 // pred_check
      _
    $region34: #{conv_block_forward.4} parent=5 // pred_check_branch
      %193 = sbr.rel (%p190) target = $region36
    $region35: #{conv_block_forward.4} parent=5 // pred_region
      %s194 = ssub.s32 %s12, 1
      %p195 = scmp.lt.s32.totalorder %s17, 1
      %s196 = scalar_select %p195, %s17, 1
      %s197 = smul.addr %s196, 8
      %s198 = scalar_lea.vmem %s0, %s197
      %p199 = pneg %p38
      %p200 = pneg %p35
      %p201 = pneg %p59
      %p202 = pneg %p56
      %p203 = pneg %p80
      %p204 = pneg %p77
      %p205 = pneg %p101
      %p206 = pneg %p98
      %p207 = pneg %p127
      %p208 = pneg %p124
      %p209 = scmp.lt.s32.totalorder %s17, 1
      %s210 = scalar_select %p209, %s17, 1
      %s211 = smul.addr %s210, 8
      %s212 = scalar_lea.vmem %s4, %s211
      %p213 = pneg %p153
      %p214 = pneg %p150
      %p215 = scmp.lt.s32.totalorder %s17, 1
      %s216 = scalar_select %p215, %s17, 1
      %s217 = smul.addr %s216, 8
      %s218 = scalar_lea.vmem %s5, %s217
      %p219 = scmp.lt.s32.totalorder %s17, 1
      %s220 = scalar_select %p219, %s17, 1
      %s221 = smul.addr %s220, 8
      %s222 = scalar_lea.vmem %s0, %s221
      %p223 = scmp.lt.s32.totalorder %s17, 1
      %s224 = scalar_select %p223, %s17, 1
      %s225 = smul.addr %s224, 8
      %s226 = scalar_lea.vmem %s4, %s225
      %p227 = scmp.lt.s32.totalorder %s17, 1
      %s228 = scalar_select %p227, %s17, 1
      %s229 = smul.addr %s228, 8
      %s230 = scalar_lea.vmem %s5, %s229
      %v231 = vld [vmem:[%s222] sm:$0xff]
      %v232 = vld [vmem:[%s2] sm:$0xff]
      %234 = vset.pattern.permute.xlu0 0
      %235 = vperm.xlu0 %234, %v232
      %v236 = vpop.permute.xlu0 %235
      %v238 = vmul.f32 %v231, %v236
      %v239 = vld [vmem:[%s3] sm:$0xff]
      %241 = vset.pattern.permute.xlu0 0
      %242 = vperm.xlu0 %241, %v239
      %v243 = vpop.permute.xlu0 %242
      %v245 = vadd.f32 %v238, %v243
      %v246 = vmax.f32 %v245, 0.0
      %v247 = vlaneseq
      %v248 = vand.u32 %v247, 127
      %vm249 = vcmp.ge.s32.totalorder %v248, 1
      %vm250 = vcmp.le.s32.totalorder %v248, 8
      %vm251 = vmand %vm249, %vm250
      %v252 = vsel %vm251, %v246, 0.0
      %v253 = vld [vmem:[%s1] sm:$0xff]
      %s254 = scalar_lea.vmem %s1, 8
      %v255 = vld [vmem:[%s254] sm:$0xff]
      %257 = vrot.lane.b32.xlu0 %v252, 127
      %v258 = vpop.permute.xlu0 %257
      %vm260 = vcmask 64512
      %v262 = vsel %vm260, %v255, 0
      %264 = vmatpush.msra.mxu0 0.0
      %265 = vmatpush.msra.mxu0 0.0
      %266 = vmatpush.msra.mxu0 0.0
      %267 = vmatpush.msra.mxu0 0.0
      %268 = vmatpush.msra.mxu0 0.0
      %269 = vmatpush.msra.mxu0 0.0
      %270 = vmatpush.msra.mxu0 0.0
      %271 = vmatpush.msra.mxu0 0.0
      %272 = vmatpush.msra.mxu0 0.0
      %273 = vmatpush.msra.mxu0 0.0
      %274 = vmatpush.msra.mxu0 0.0
      %275 = vmatpush.msra.mxu0 0.0
      %276 = vmatpush.msra.mxu0 0.0
      %277 = vmatpush.msra.mxu0 0.0
      %278 = vmatpush.msra.mxu0 0.0
      %279 = vmatpush.msra.mxu0 %v258
      %280 = vmatmul.f32.gmra.mxu0 %v262
      %v281 = vpop.f32.mrf.mxu0
      %v282 = vadd.f32 0.0, %v281
      %283 = vdwg.mxu0
      %v285 = vsel %vm260, %v253, 0
      %287 = vmatpush.msra.mxu0 0.0
      %288 = vmatpush.msra.mxu0 0.0
      %289 = vmatpush.msra.mxu0 0.0
      %290 = vmatpush.msra.mxu0 0.0
      %291 = vmatpush.msra.mxu0 0.0
      %292 = vmatpush.msra.mxu0 0.0
      %293 = vmatpush.msra.mxu0 0.0
      %294 = vmatpush.msra.mxu0 0.0
      %295 = vmatpush.msra.mxu0 0.0
      %296 = vmatpush.msra.mxu0 0.0
      %297 = vmatpush.msra.mxu0 0.0
      %298 = vmatpush.msra.mxu0 0.0
      %299 = vmatpush.msra.mxu0 0.0
      %300 = vmatpush.msra.mxu0 0.0
      %301 = vmatpush.msra.mxu0 0.0
      %302 = vmatpush.msra.mxu0 %v252
      %303 = vmatmul.f32.gmra.mxu0 %v285
      %v304 = vpop.f32.mrf.mxu0
      %v305 = vadd.f32 %v282, %v304
      %306 = vdwg.mxu0
      %s307 = scalar_lea.vmem %s1, 16
      %v308 = vld [vmem:[%s307] sm:$0xff]
      %309 = vrot.lane.b32.xlu0 %v252, 126
      %v310 = vpop.permute.xlu0 %309
      %v313 = vsel %vm260, %v308, 0
      %315 = vmatpush.msra.mxu0 0.0
      %316 = vmatpush.msra.mxu0 0.0
      %317 = vmatpush.msra.mxu0 0.0
      %318 = vmatpush.msra.mxu0 0.0
      %319 = vmatpush.msra.mxu0 0.0
      %320 = vmatpush.msra.mxu0 0.0
      %321 = vmatpush.msra.mxu0 0.0
      %322 = vmatpush.msra.mxu0 0.0
      %323 = vmatpush.msra.mxu0 0.0
      %324 = vmatpush.msra.mxu0 0.0
      %325 = vmatpush.msra.mxu0 0.0
      %326 = vmatpush.msra.mxu0 0.0
      %327 = vmatpush.msra.mxu0 0.0
      %328 = vmatpush.msra.mxu0 0.0
      %329 = vmatpush.msra.mxu0 0.0
      %330 = vmatpush.msra.mxu0 %v310
      %331 = vmatmul.f32.gmra.mxu0 %v313
      %v332 = vpop.f32.mrf.mxu0
      %v333 = vadd.f32 0.0, %v332
      %334 = vdwg.mxu0
      %v335 = vadd.f32 %v305, %v333
      %336 = vst.msk [vmem:[%s226] sm:$0xff] %vm260, %v335
      %v337 = vsel %vm260, %v335, 0.0
      %338 = vadd.xlane.f32.xlu0 %v337
      %v339 = vpop.xlane.xlu0 %338
      %v340 = vmul.f32 %v335, %v335
      %v341 = vsel %vm260, %v340, 0.0
      %342 = vadd.xlane.f32.xlu0 %v341
      %v343 = vpop.xlane.xlu0 %342
      %vm344 = vcmask 7168
      %v345 = vsel %vm344, %v339, %v343
      %vm346 = vcmask 15360
      %347 = vst.msk [vmem:[%s230] sm:$0xff] %vm346, %v345
      %p348 = scmp.lt.s32.totalorder %s17, 1
      %s349 = scalar_select %p348, %s17, 1
      %s350 = smul.addr %s349, 8
      %s351 = scalar_lea.vmem %s4, %s350
      %p352 = scmp.lt.s32.totalorder %s17, 1
      %s353 = scalar_select %p352, %s17, 1
      %s354 = smul.addr %s353, 8
      %s355 = scalar_lea.vmem %s5, %s354
      // Predicated region
      $region37: #{conv_block_forward.4} parent=35 // pred_check
        %p356 = pneg %p124
      $region38: #{conv_block_forward.4} parent=35 // pred_check_branch
        %358 = sbr.rel (%p356) target = $region40
      $region39: #{conv_block_forward.4} parent=35 // pred_region
        _
      $region40: #{conv_block_forward.4} parent=35 // pred_fallthru
        _
      // Predicated region
      $region41: #{conv_block_forward.4} parent=35 // pred_check
        %p359 = pneg %p150
      $region42: #{conv_block_forward.4} parent=35 // pred_check_branch
        %361 = sbr.rel (%p359) target = $region44
      $region43: #{conv_block_forward.4} parent=35 // pred_region
        _
      $region44: #{conv_block_forward.4} parent=35 // pred_fallthru
        _
    $region36: #{conv_block_forward.4} parent=5 // pred_fallthru
      _
    %p362 = scmp.le.s32.totalorder 2, %s12
    // Predicated region
    $region45: #{conv_block_forward.4} parent=5 // pred_check
      %p363 = pneg %p362
    $region46: #{conv_block_forward.4} parent=5 // pred_check_branch
      %365 = sbr.rel (%p363) target = $region48
    $region47: #{conv_block_forward.4} parent=5 // pred_region
      %s366 = ssub.s32 %s12, 2
      // Predicated region
      $region49: #{conv_block_forward.4} parent=47 // pred_check
        %p367 = pneg %p130
      $region50: #{conv_block_forward.4} parent=47 // pred_check_branch
        %369 = sbr.rel (%p367) target = $region52
      $region51: #{conv_block_forward.4} parent=47 // pred_region
        %p370 = scmp.lt.s32.totalorder %s18, 1
        %s371 = scalar_select %p370, %s18, 1
        %s372 = smul.addr %s371, 8
        %s373 = scalar_lea.vmem %s4, %s372
      $region52: #{conv_block_forward.4} parent=47 // pred_fallthru
        _
      // Predicated region
      $region53: #{conv_block_forward.4} parent=47 // pred_check
        %p374 = pneg %p156
      $region54: #{conv_block_forward.4} parent=47 // pred_check_branch
        %376 = sbr.rel (%p374) target = $region56
      $region55: #{conv_block_forward.4} parent=47 // pred_region
        %p377 = scmp.lt.s32.totalorder %s18, 1
        %s378 = scalar_select %p377, %s18, 1
        %s379 = smul.addr %s378, 8
        %s380 = scalar_lea.vmem %s5, %s379
      $region56: #{conv_block_forward.4} parent=47 // pred_fallthru
        _
    $region48: #{conv_block_forward.4} parent=5 // pred_fallthru
      _
  $region6: #{conv_block_forward.4} parent=0 // loop_footer
    %s16 = sadd.s32 1, %s12
  $region7: #{conv_block_forward.4} parent=0 // loop_footer_branch
    %11 = sbr.rel target = $region3
  $region8: #{conv_block_forward.4} parent=0 // loop_exit
    _

</llo_original>
